<compile_context>
chip_gen: v6e
topology: v6e:2x2x1
jax: 0.10.0
libtpu: 0.0.40
codegen_flags: <defaults>
</compile_context>

<pallas_src>
import jax
import jax.numpy as jnp
from jax.experimental import pallas as pl
from jax.experimental.pallas import tpu as pltpu  # noqa: F401  (TPU backend)


# ------------------------------ Fused kernel ------------------------------- #

def _down_kernel(x_ref, w1_ref, g1_ref, b1_ref, w2_ref, g2_ref, b2_ref, o_ref):
    # x_ref : (N, Hh, Wh, 4*Cin)  pooled-window corners packed along channels
    # w*_ref: (9*Cin_layer, Cout_layer)  pre-reshaped HWIO weights
    # g/b   : (1, Cout_layer)            BN gamma / beta
    # o_ref : (Cout, N*Hh*Wh)            lane-dense output slab
    n, hh, wh, c4 = x_ref.shape
    cin = c4 // 4
    cmid = w1_ref.shape[-1]
    npix = n * hh * wh

    xg = x_ref[...].astype(jnp.float32)
    # 2x2 max-pool: the four window corners are channel groups of width cin.
    p = jnp.maximum(
        jnp.maximum(xg[..., 0 * cin:1 * cin], xg[..., 1 * cin:2 * cin]),
        jnp.maximum(xg[..., 2 * cin:3 * cin], xg[..., 3 * cin:4 * cin]))

    def conv_bn_relu(a, w_ref, g_ref, b_ref):
        # a: (n, hh, wh, ci) f32 activation.
        ci = a.shape[-1]
        # Zero halo (padding=1) built in VMEM (no wrapper-side jnp.pad).
        zw = jnp.zeros((n, hh, 1, ci), jnp.float32)
        ap = jnp.concatenate([zw, a, zw], axis=2)            # (n, hh, wh+2, ci)
        zh = jnp.zeros((n, 1, wh + 2, ci), jnp.float32)
        ap = jnp.concatenate([zh, ap, zh], axis=1)           # (n, hh+2, wh+2, ci)
        # im2col: 9 shifted windows concatenated along channels -> single
        # K = 9*ci matmul on the MXU (vs. nine tiny K=ci dots before).
        cols = [ap[:, dy:dy + hh, dx:dx + wh, :]
                for dy in range(3) for dx in range(3)]
        pm = jnp.concatenate(cols, axis=-1).reshape(npix, 9 * ci)
        y = jnp.dot(pm, w_ref[...], preferred_element_type=jnp.float32)
        # Train-mode BatchNorm (biased batch stats) folded into one FMA + ReLU.
        mean = jnp.sum(y, axis=0, keepdims=True) / npix
        var = jnp.sum((y - mean) ** 2, axis=0, keepdims=True) / npix
        scale = g_ref[...] * jax.lax.rsqrt(var + 1e-5)
        bias = b_ref[...] - mean * scale
        return jnp.maximum(y * scale + bias, 0.0)            # (npix, co)

    a1 = conv_bn_relu(p, w1_ref, g1_ref, b1_ref).reshape(n, hh, wh, cmid)
    a2 = conv_bn_relu(a1, w2_ref, g2_ref, b2_ref)            # (npix, cout)

    # Lane-dense store: (cout, npix) puts npix (=128 here) on the lane axis.
    o_ref[...] = jnp.transpose(a2, (1, 0)).astype(o_ref.dtype)


# --------------------------------- Wrapper ---------------------------------- #

@jax.jit
def down_forward(x_nchw, w1_hwio, g1, b1, w2_hwio, g2, b2):
    N, Cin, H, W = x_nchw.shape
    assert H % 2 == 0 and W % 2 == 0, "MaxPool2d(2) path assumes even H, W"
    Hh, Wh = H // 2, W // 2
    Cmid = w1_hwio.shape[-1]
    Cout = w2_hwio.shape[-1]

    # Single input rearrangement: NCHW -> (N, Hh, Wh, 4*Cin), where the 4
    # channel groups are the 2x2 pooling-window corners.  This fuses the
    # NCHW->NHWC layout change with the pool-corner extraction (one XLA
    # transpose total, no stride-2 slices).
    xg = x_nchw.reshape(N, Cin, Hh, 2, Wh, 2)
    xg = jnp.transpose(xg, (0, 2, 4, 3, 5, 1)).reshape(N, Hh, Wh, 4 * Cin)

    # Weights pre-reshaped once to (9*Cin_layer, Cout_layer) matmul slabs.
    w1m = w1_hwio.reshape(9 * Cin, Cmid)
    w2m = w2_hwio.reshape(9 * Cmid, Cout)

    out = pl.pallas_call(
        _down_kernel,
        out_shape=jax.ShapeDtypeStruct((Cout, N * Hh * Wh), jnp.float32),
        # No grid: the whole (tiny) problem is one VMEM-resident invocation;
        # default BlockSpecs map every operand fully into VMEM.
    )(xg, w1m, g1.reshape(1, Cmid), b1.reshape(1, Cmid),
      w2m, g2.reshape(1, Cout), b2.reshape(1, Cout))

    # (Cout, N*Hh*Wh) -> NCHW: leading-dim permute only (no minor-dim relayout).
    return jnp.transpose(out.reshape(Cout, N, Hh, Wh), (1, 0, 2, 3))


# ----------------------------- Pure-JAX reference ---------------------------- #

def _ref_forward(x_nchw, w1, g1, b1, w2, g2, b2):
    x = jnp.transpose(x_nchw, (0, 2, 3, 1))
    x = jax.lax.reduce_window(x, -jnp.inf, jax.lax.max,
                              (1, 2, 2, 1), (1, 2, 2, 1), "VALID")

    def cbr(inp, w, g, b):
        y = jax.lax.conv_general_dilated(
            inp, w, (1, 1), "SAME",
            dimension_numbers=("NHWC", "HWIO", "NHWC"))
        mean = jnp.mean(y, axis=(0, 1, 2))
        var = jnp.var(y, axis=(0, 1, 2))
        y = (y - mean) * jax.lax.rsqrt(var + 1e-5) * g + b
        return jnp.maximum(y, 0.0)

    x = cbr(x, w1, g1, b1)
    x = cbr(x, w2, g2, b2)
    return jnp.transpose(x, (0, 3, 1, 2))


# ------------------------------------ Main ----------------------------------- #

if __name__ == "__main__":
    key = jax.random.PRNGKey(0)
    k_x, k_w1, k_w2 = jax.random.split(key, 3)

    N, C_IN, C_OUT, H, W = 2, 4, 8, 16, 16          # small UNet-Down shapes
    x = jax.random.normal(k_x, (N, C_IN, H, W), jnp.float32)

    # Conv2d has no bias; a fresh BatchNorm2d has gamma=1, beta=0.
    w1 = 0.1 * jax.random.normal(k_w1, (3, 3, C_IN, C_OUT), jnp.float32)   # HWIO
    w2 = 0.1 * jax.random.normal(k_w2, (3, 3, C_OUT, C_OUT), jnp.float32)  # HWIO
    g1 = jnp.ones((C_OUT,), jnp.float32)
    b1 = jnp.zeros((C_OUT,), jnp.float32)
    g2 = jnp.ones((C_OUT,), jnp.float32)
    b2 = jnp.zeros((C_OUT,), jnp.float32)

    out = down_forward(x, w1, g1, b1, w2, g2, b2)
    out = jax.block_until_ready(out)
    assert out.shape == (N, C_OUT, H // 2, W // 2), out.shape

    ref = jax.block_until_ready(_ref_forward(x, w1, g1, b1, w2, g2, b2))
    assert jnp.allclose(out, ref, atol=2e-3, rtol=2e-3), \
        float(jnp.max(jnp.abs(out - ref)))

    print("KERNEL_OK")
</pallas_src>

<mosaic_0001>
module attributes {stable_mosaic.version = 11 : i64} {
  func.func @_down_kernel(%arg0: memref<2x8x8x16xf32, #tpu.memory_space<vmem>>, %arg1: memref<36x8xf32, #tpu.memory_space<vmem>>, %arg2: memref<1x8xf32, #tpu.memory_space<vmem>>, %arg3: memref<1x8xf32, #tpu.memory_space<vmem>>, %arg4: memref<72x8xf32, #tpu.memory_space<vmem>>, %arg5: memref<1x8xf32, #tpu.memory_space<vmem>>, %arg6: memref<1x8xf32, #tpu.memory_space<vmem>>, %arg7: memref<8x128xf32, #tpu.memory_space<vmem>>) attributes {dimension_semantics = [], scalar_prefetch = 0 : i64, scratch_operands = 0 : i64, tpu.core_type = #tpu.core_type<tc>} {
    %c0 = arith.constant 0 : index
    %c0_0 = arith.constant 0 : index
    %c0_1 = arith.constant 0 : index
    %c0_2 = arith.constant 0 : index
    %0 = vector.load %arg0[%c0, %c0_0, %c0_1, %c0_2] : memref<2x8x8x16xf32, #tpu.memory_space<vmem>>, vector<2x8x8x16xf32>
    %1 = vector.extract_strided_slice %0 {offsets = [0, 0, 0, 0], sizes = [2, 8, 8, 4], strides = [1, 1, 1, 1]} : vector<2x8x8x16xf32> to vector<2x8x8x4xf32>
    %2 = vector.extract_strided_slice %0 {offsets = [0, 0, 0, 4], sizes = [2, 8, 8, 4], strides = [1, 1, 1, 1]} : vector<2x8x8x16xf32> to vector<2x8x8x4xf32>
    %3 = arith.maximumf %1, %2 : vector<2x8x8x4xf32>
    %4 = vector.extract_strided_slice %0 {offsets = [0, 0, 0, 8], sizes = [2, 8, 8, 4], strides = [1, 1, 1, 1]} : vector<2x8x8x16xf32> to vector<2x8x8x4xf32>
    %5 = vector.extract_strided_slice %0 {offsets = [0, 0, 0, 12], sizes = [2, 8, 8, 4], strides = [1, 1, 1, 1]} : vector<2x8x8x16xf32> to vector<2x8x8x4xf32>
    %6 = arith.maximumf %4, %5 : vector<2x8x8x4xf32>
    %7 = arith.maximumf %3, %6 : vector<2x8x8x4xf32>
    %cst = arith.constant 0.000000e+00 : f32
    %8 = vector.broadcast %cst : f32 to vector<2x8x1x4xf32>
    %9 = tpu.concatenate %8, %7, %8 in 2 : vector<2x8x1x4xf32>, vector<2x8x8x4xf32>, vector<2x8x1x4xf32> -> vector<2x8x10x4xf32>
    %cst_3 = arith.constant 0.000000e+00 : f32
    %10 = vector.broadcast %cst_3 : f32 to vector<2x1x10x4xf32>
    %11 = tpu.concatenate %10, %9, %10 in 1 : vector<2x1x10x4xf32>, vector<2x8x10x4xf32>, vector<2x1x10x4xf32> -> vector<2x10x10x4xf32>
    %12 = vector.extract_strided_slice %11 {offsets = [0, 0, 0, 0], sizes = [2, 8, 8, 4], strides = [1, 1, 1, 1]} : vector<2x10x10x4xf32> to vector<2x8x8x4xf32>
    %13 = vector.extract_strided_slice %11 {offsets = [0, 0, 1, 0], sizes = [2, 8, 8, 4], strides = [1, 1, 1, 1]} : vector<2x10x10x4xf32> to vector<2x8x8x4xf32>
    %14 = vector.extract_strided_slice %11 {offsets = [0, 0, 2, 0], sizes = [2, 8, 8, 4], strides = [1, 1, 1, 1]} : vector<2x10x10x4xf32> to vector<2x8x8x4xf32>
    %15 = vector.extract_strided_slice %11 {offsets = [0, 1, 0, 0], sizes = [2, 8, 8, 4], strides = [1, 1, 1, 1]} : vector<2x10x10x4xf32> to vector<2x8x8x4xf32>
    %16 = vector.extract_strided_slice %11 {offsets = [0, 1, 1, 0], sizes = [2, 8, 8, 4], strides = [1, 1, 1, 1]} : vector<2x10x10x4xf32> to vector<2x8x8x4xf32>
    %17 = vector.extract_strided_slice %11 {offsets = [0, 1, 2, 0], sizes = [2, 8, 8, 4], strides = [1, 1, 1, 1]} : vector<2x10x10x4xf32> to vector<2x8x8x4xf32>
    %18 = vector.extract_strided_slice %11 {offsets = [0, 2, 0, 0], sizes = [2, 8, 8, 4], strides = [1, 1, 1, 1]} : vector<2x10x10x4xf32> to vector<2x8x8x4xf32>
    %19 = vector.extract_strided_slice %11 {offsets = [0, 2, 1, 0], sizes = [2, 8, 8, 4], strides = [1, 1, 1, 1]} : vector<2x10x10x4xf32> to vector<2x8x8x4xf32>
    %20 = vector.extract_strided_slice %11 {offsets = [0, 2, 2, 0], sizes = [2, 8, 8, 4], strides = [1, 1, 1, 1]} : vector<2x10x10x4xf32> to vector<2x8x8x4xf32>
    %21 = tpu.concatenate %12, %13, %14, %15, %16, %17, %18, %19, %20 in 3 : vector<2x8x8x4xf32>, vector<2x8x8x4xf32>, vector<2x8x8x4xf32>, vector<2x8x8x4xf32>, vector<2x8x8x4xf32>, vector<2x8x8x4xf32>, vector<2x8x8x4xf32>, vector<2x8x8x4xf32>, vector<2x8x8x4xf32> -> vector<2x8x8x36xf32>
    %22 = vector.shape_cast %21 : vector<2x8x8x36xf32> to vector<128x36xf32>
    %c0_4 = arith.constant 0 : index
    %c0_5 = arith.constant 0 : index
    %23 = vector.load %arg1[%c0_4, %c0_5] : memref<36x8xf32, #tpu.memory_space<vmem>>, vector<36x8xf32>
    %cst_6 = arith.constant dense<0.000000e+00> : vector<128x8xf32>
    %24 = tpu.matmul %22, %23, %cst_6 {dimension_numbers = #tpu.dot_dimension_numbers<[1], [0], [0], [1], [0, 0, 1, 1], [], []>} : vector<128x36xf32>, vector<36x8xf32>, vector<128x8xf32> -> vector<128x8xf32>
    %cst_7 = arith.constant dense<0.000000e+00> : vector<8xf32>
    %25 = vector.multi_reduction <add>, %24, %cst_7 [0] : vector<128x8xf32> to vector<8xf32>
    %26 = vector.shape_cast %25 : vector<8xf32> to vector<1x8xf32>
    %cst_8 = arith.constant 1.280000e+02 : f32
    %27 = vector.broadcast %cst_8 : f32 to vector<1x8xf32>
    %28 = arith.divf %26, %27 : vector<1x8xf32>
    %29 = vector.broadcast %28 : vector<1x8xf32> to vector<128x8xf32>
    %30 = arith.subf %24, %29 : vector<128x8xf32>
    %31 = arith.mulf %30, %30 : vector<128x8xf32>
    %cst_9 = arith.constant dense<0.000000e+00> : vector<8xf32>
    %32 = vector.multi_reduction <add>, %31, %cst_9 [0] : vector<128x8xf32> to vector<8xf32>
    %33 = vector.shape_cast %32 : vector<8xf32> to vector<1x8xf32>
    %cst_10 = arith.constant 1.280000e+02 : f32
    %34 = vector.broadcast %cst_10 : f32 to vector<1x8xf32>
    %35 = arith.divf %33, %34 : vector<1x8xf32>
    %c0_11 = arith.constant 0 : index
    %c0_12 = arith.constant 0 : index
    %36 = vector.load %arg2[%c0_11, %c0_12] : memref<1x8xf32, #tpu.memory_space<vmem>>, vector<1x8xf32>
    %cst_13 = arith.constant 9.99999974E-6 : f32
    %37 = vector.broadcast %cst_13 : f32 to vector<1x8xf32>
    %38 = arith.addf %35, %37 : vector<1x8xf32>
    %39 = math.rsqrt %38 : vector<1x8xf32>
    %40 = arith.mulf %36, %39 : vector<1x8xf32>
    %c0_14 = arith.constant 0 : index
    %c0_15 = arith.constant 0 : index
    %41 = vector.load %arg3[%c0_14, %c0_15] : memref<1x8xf32, #tpu.memory_space<vmem>>, vector<1x8xf32>
    %42 = arith.mulf %28, %40 : vector<1x8xf32>
    %43 = arith.subf %41, %42 : vector<1x8xf32>
    %44 = vector.broadcast %40 : vector<1x8xf32> to vector<128x8xf32>
    %45 = arith.mulf %24, %44 : vector<128x8xf32>
    %46 = vector.broadcast %43 : vector<1x8xf32> to vector<128x8xf32>
    %47 = arith.addf %45, %46 : vector<128x8xf32>
    %cst_16 = arith.constant 0.000000e+00 : f32
    %48 = vector.broadcast %cst_16 : f32 to vector<128x8xf32>
    %49 = arith.maximumf %47, %48 : vector<128x8xf32>
    %50 = vector.shape_cast %49 : vector<128x8xf32> to vector<2x8x8x8xf32>
    %cst_17 = arith.constant 0.000000e+00 : f32
    %51 = vector.broadcast %cst_17 : f32 to vector<2x8x1x8xf32>
    %52 = tpu.concatenate %51, %50, %51 in 2 : vector<2x8x1x8xf32>, vector<2x8x8x8xf32>, vector<2x8x1x8xf32> -> vector<2x8x10x8xf32>
    %cst_18 = arith.constant 0.000000e+00 : f32
    %53 = vector.broadcast %cst_18 : f32 to vector<2x1x10x8xf32>
    %54 = tpu.concatenate %53, %52, %53 in 1 : vector<2x1x10x8xf32>, vector<2x8x10x8xf32>, vector<2x1x10x8xf32> -> vector<2x10x10x8xf32>
    %55 = vector.extract_strided_slice %54 {offsets = [0, 0, 0, 0], sizes = [2, 8, 8, 8], strides = [1, 1, 1, 1]} : vector<2x10x10x8xf32> to vector<2x8x8x8xf32>
    %56 = vector.extract_strided_slice %54 {offsets = [0, 0, 1, 0], sizes = [2, 8, 8, 8], strides = [1, 1, 1, 1]} : vector<2x10x10x8xf32> to vector<2x8x8x8xf32>
    %57 = vector.extract_strided_slice %54 {offsets = [0, 0, 2, 0], sizes = [2, 8, 8, 8], strides = [1, 1, 1, 1]} : vector<2x10x10x8xf32> to vector<2x8x8x8xf32>
    %58 = vector.extract_strided_slice %54 {offsets = [0, 1, 0, 0], sizes = [2, 8, 8, 8], strides = [1, 1, 1, 1]} : vector<2x10x10x8xf32> to vector<2x8x8x8xf32>
    %59 = vector.extract_strided_slice %54 {offsets = [0, 1, 1, 0], sizes = [2, 8, 8, 8], strides = [1, 1, 1, 1]} : vector<2x10x10x8xf32> to vector<2x8x8x8xf32>
    %60 = vector.extract_strided_slice %54 {offsets = [0, 1, 2, 0], sizes = [2, 8, 8, 8], strides = [1, 1, 1, 1]} : vector<2x10x10x8xf32> to vector<2x8x8x8xf32>
    %61 = vector.extract_strided_slice %54 {offsets = [0, 2, 0, 0], sizes = [2, 8, 8, 8], strides = [1, 1, 1, 1]} : vector<2x10x10x8xf32> to vector<2x8x8x8xf32>
    %62 = vector.extract_strided_slice %54 {offsets = [0, 2, 1, 0], sizes = [2, 8, 8, 8], strides = [1, 1, 1, 1]} : vector<2x10x10x8xf32> to vector<2x8x8x8xf32>
    %63 = vector.extract_strided_slice %54 {offsets = [0, 2, 2, 0], sizes = [2, 8, 8, 8], strides = [1, 1, 1, 1]} : vector<2x10x10x8xf32> to vector<2x8x8x8xf32>
    %64 = tpu.concatenate %55, %56, %57, %58, %59, %60, %61, %62, %63 in 3 : vector<2x8x8x8xf32>, vector<2x8x8x8xf32>, vector<2x8x8x8xf32>, vector<2x8x8x8xf32>, vector<2x8x8x8xf32>, vector<2x8x8x8xf32>, vector<2x8x8x8xf32>, vector<2x8x8x8xf32>, vector<2x8x8x8xf32> -> vector<2x8x8x72xf32>
    %65 = vector.shape_cast %64 : vector<2x8x8x72xf32> to vector<128x72xf32>
    %c0_19 = arith.constant 0 : index
    %c0_20 = arith.constant 0 : index
    %66 = vector.load %arg4[%c0_19, %c0_20] : memref<72x8xf32, #tpu.memory_space<vmem>>, vector<72x8xf32>
    %cst_21 = arith.constant dense<0.000000e+00> : vector<128x8xf32>
    %67 = tpu.matmul %65, %66, %cst_21 {dimension_numbers = #tpu.dot_dimension_numbers<[1], [0], [0], [1], [0, 0, 1, 1], [], []>} : vector<128x72xf32>, vector<72x8xf32>, vector<128x8xf32> -> vector<128x8xf32>
    %cst_22 = arith.constant dense<0.000000e+00> : vector<8xf32>
    %68 = vector.multi_reduction <add>, %67, %cst_22 [0] : vector<128x8xf32> to vector<8xf32>
    %69 = vector.shape_cast %68 : vector<8xf32> to vector<1x8xf32>
    %cst_23 = arith.constant 1.280000e+02 : f32
    %70 = vector.broadcast %cst_23 : f32 to vector<1x8xf32>
    %71 = arith.divf %69, %70 : vector<1x8xf32>
    %72 = vector.broadcast %71 : vector<1x8xf32> to vector<128x8xf32>
    %73 = arith.subf %67, %72 : vector<128x8xf32>
    %74 = arith.mulf %73, %73 : vector<128x8xf32>
    %cst_24 = arith.constant dense<0.000000e+00> : vector<8xf32>
    %75 = vector.multi_reduction <add>, %74, %cst_24 [0] : vector<128x8xf32> to vector<8xf32>
    %76 = vector.shape_cast %75 : vector<8xf32> to vector<1x8xf32>
    %cst_25 = arith.constant 1.280000e+02 : f32
    %77 = vector.broadcast %cst_25 : f32 to vector<1x8xf32>
    %78 = arith.divf %76, %77 : vector<1x8xf32>
    %c0_26 = arith.constant 0 : index
    %c0_27 = arith.constant 0 : index
    %79 = vector.load %arg5[%c0_26, %c0_27] : memref<1x8xf32, #tpu.memory_space<vmem>>, vector<1x8xf32>
    %cst_28 = arith.constant 9.99999974E-6 : f32
    %80 = vector.broadcast %cst_28 : f32 to vector<1x8xf32>
    %81 = arith.addf %78, %80 : vector<1x8xf32>
    %82 = math.rsqrt %81 : vector<1x8xf32>
    %83 = arith.mulf %79, %82 : vector<1x8xf32>
    %c0_29 = arith.constant 0 : index
    %c0_30 = arith.constant 0 : index
    %84 = vector.load %arg6[%c0_29, %c0_30] : memref<1x8xf32, #tpu.memory_space<vmem>>, vector<1x8xf32>
    %85 = arith.mulf %71, %83 : vector<1x8xf32>
    %86 = arith.subf %84, %85 : vector<1x8xf32>
    %87 = vector.broadcast %83 : vector<1x8xf32> to vector<128x8xf32>
    %88 = arith.mulf %67, %87 : vector<128x8xf32>
    %89 = vector.broadcast %86 : vector<1x8xf32> to vector<128x8xf32>
    %90 = arith.addf %88, %89 : vector<128x8xf32>
    %cst_31 = arith.constant 0.000000e+00 : f32
    %91 = vector.broadcast %cst_31 : f32 to vector<128x8xf32>
    %92 = arith.maximumf %90, %91 : vector<128x8xf32>
    %93 = tpu.transpose %92, [1, 0] : vector<128x8xf32> -> vector<8x128xf32>
    %c0_32 = arith.constant 0 : index
    %c0_33 = arith.constant 0 : index
    %94 = vector.load %arg7[%c0_32, %c0_33] : memref<8x128xf32, #tpu.memory_space<vmem>>, vector<8x128xf32>
    tpu.vector_store %arg7[%c0_32, %c0_33], %93 {strides = array<i32>} : memref<8x128xf32, #tpu.memory_space<vmem>>, vector<8x128xf32>,
    return
  }
}

</mosaic_0001>

<llo_original>
// kernel: down_forward.1
$region0: #{down_forward.1}
  #allocation0 [shape = 'u32[]', space=smem, size = 0x4, offset = 0x4, fixed_abs, tag = 'smem constant byte address 0x4 - core index']
  #allocation1 [shape = 'u32[144,128]{1,0:T(1,128)}', space=vmem, size = 0x12000, scoped, tag = 'internal scratch']
  %s0 = inlined_call_operand.vmem [shape: f32[2,8,8,16], index: 0, kind: input, shape index: {}]
  %s1 = inlined_call_operand.vmem [shape: f32[36,8], index: 1, kind: input, shape index: {}]
  %s2 = inlined_call_operand.vmem [shape: f32[1,8], index: 2, kind: input, shape index: {}]
  %s3 = inlined_call_operand.vmem [shape: f32[1,8], index: 3, kind: input, shape index: {}]
  %s4 = inlined_call_operand.vmem [shape: f32[72,8], index: 4, kind: input, shape index: {}]
  %s5 = inlined_call_operand.vmem [shape: f32[1,8], index: 5, kind: input, shape index: {}]
  %s6 = inlined_call_operand.vmem [shape: f32[1,8], index: 6, kind: input, shape index: {}]
  %s7 = inlined_call_operand.vmem [shape: f32[8,128], index: 7, kind: output, shape index: {}]
  %s8 = sld [smem:[#allocation0]]
  $region38: #{down_forward.1} parent=0
    _
  %s10 = ssub.s32 1, %s8
  %s11 = scalar_select 0, %s10, %s8
  // Predicated region
  $region2: #{down_forward.1} parent=0 // pred_check
    _
  $region3: #{down_forward.1} parent=0 // pred_check_branch
    %13 = sbr.rel (0) target = $region5
  $region4: #{down_forward.1} parent=0 // pred_region
    _
  $region5: #{down_forward.1} parent=0 // pred_fallthru
    _
  // Predicated region
  $region6: #{down_forward.1} parent=0 // pred_check
    _
  $region7: #{down_forward.1} parent=0 // pred_check_branch
    %15 = sbr.rel (0) target = $region9
  $region8: #{down_forward.1} parent=0 // pred_region
    _
  $region9: #{down_forward.1} parent=0 // pred_fallthru
    _
  // Predicated region
  $region10: #{down_forward.1} parent=0 // pred_check
    _
  $region11: #{down_forward.1} parent=0 // pred_check_branch
    %17 = sbr.rel (0) target = $region13
  $region12: #{down_forward.1} parent=0 // pred_region
    _
  $region13: #{down_forward.1} parent=0 // pred_fallthru
    _
  // Predicated region
  $region14: #{down_forward.1} parent=0 // pred_check
    _
  $region15: #{down_forward.1} parent=0 // pred_check_branch
    %19 = sbr.rel (0) target = $region17
  $region16: #{down_forward.1} parent=0 // pred_region
    _
  $region17: #{down_forward.1} parent=0 // pred_fallthru
    _
  // Predicated region
  $region18: #{down_forward.1} parent=0 // pred_check
    _
  $region19: #{down_forward.1} parent=0 // pred_check_branch
    %21 = sbr.rel (0) target = $region21
  $region20: #{down_forward.1} parent=0 // pred_region
    _
  $region21: #{down_forward.1} parent=0 // pred_fallthru
    _
  // Predicated region
  $region22: #{down_forward.1} parent=0 // pred_check
    _
  $region23: #{down_forward.1} parent=0 // pred_check_branch
    %23 = sbr.rel (0) target = $region25
  $region24: #{down_forward.1} parent=0 // pred_region
    _
  $region25: #{down_forward.1} parent=0 // pred_fallthru
    _
  // Predicated region
  $region26: #{down_forward.1} parent=0 // pred_check
    _
  $region27: #{down_forward.1} parent=0 // pred_check_branch
    %25 = sbr.rel (0) target = $region29
  $region28: #{down_forward.1} parent=0 // pred_region
    _
  $region29: #{down_forward.1} parent=0 // pred_fallthru
    _
  %v26 = vld [vmem:[%s0] sm:$0xff]
  %v27 = vld [vmem:[%s0 + $0x8] sm:$0xff]
  %v28 = vld [vmem:[%s0 + $0x10] sm:$0xff]
  %v29 = vld [vmem:[%s0 + $0x18] sm:$0xff]
  %v30 = vld [vmem:[%s0 + $0x20] sm:$0xff]
  %v31 = vld [vmem:[%s0 + $0x28] sm:$0xff]
  %v32 = vld [vmem:[%s0 + $0x30] sm:$0xff]
  %v33 = vld [vmem:[%s0 + $0x38] sm:$0xff]
  %v34 = vld [vmem:[%s0 + $0x40] sm:$0xff]
  %v35 = vld [vmem:[%s0 + $0x48] sm:$0xff]
  %v36 = vld [vmem:[%s0 + $0x50] sm:$0xff]
  %v37 = vld [vmem:[%s0 + $0x58] sm:$0xff]
  %v38 = vld [vmem:[%s0 + $0x60] sm:$0xff]
  %v39 = vld [vmem:[%s0 + $0x68] sm:$0xff]
  %v40 = vld [vmem:[%s0 + $0x70] sm:$0xff]
  %v41 = vld [vmem:[%s0 + $0x78] sm:$0xff]
  %58 = vrot.lane.b32.xlu0 %v26, 124
  %v59 = vpop.permute.xlu0 %58
  %60 = vrot.lane.b32.xlu0 %v27, 124
  %v61 = vpop.permute.xlu0 %60
  %62 = vrot.lane.b32.xlu0 %v28, 124
  %v63 = vpop.permute.xlu0 %62
  %64 = vrot.lane.b32.xlu0 %v29, 124
  %v65 = vpop.permute.xlu0 %64
  %66 = vrot.lane.b32.xlu0 %v30, 124
  %v67 = vpop.permute.xlu0 %66
  %68 = vrot.lane.b32.xlu0 %v31, 124
  %v69 = vpop.permute.xlu0 %68
  %70 = vrot.lane.b32.xlu0 %v32, 124
  %v71 = vpop.permute.xlu0 %70
  %72 = vrot.lane.b32.xlu0 %v33, 124
  %v73 = vpop.permute.xlu0 %72
  %74 = vrot.lane.b32.xlu0 %v34, 124
  %v75 = vpop.permute.xlu0 %74
  %76 = vrot.lane.b32.xlu0 %v35, 124
  %v77 = vpop.permute.xlu0 %76
  %78 = vrot.lane.b32.xlu0 %v36, 124
  %v79 = vpop.permute.xlu0 %78
  %80 = vrot.lane.b32.xlu0 %v37, 124
  %v81 = vpop.permute.xlu0 %80
  %82 = vrot.lane.b32.xlu0 %v38, 124
  %v83 = vpop.permute.xlu0 %82
  %84 = vrot.lane.b32.xlu0 %v39, 124
  %v85 = vpop.permute.xlu0 %84
  %86 = vrot.lane.b32.xlu0 %v40, 124
  %v87 = vpop.permute.xlu0 %86
  %88 = vrot.lane.b32.xlu0 %v41, 124
  %v89 = vpop.permute.xlu0 %88
  %v106 = vmax.f32 %v26, %v59
  %v107 = vmax.f32 %v27, %v61
  %v108 = vmax.f32 %v28, %v63
  %v109 = vmax.f32 %v29, %v65
  %v110 = vmax.f32 %v30, %v67
  %v111 = vmax.f32 %v31, %v69
  %v112 = vmax.f32 %v32, %v71
  %v113 = vmax.f32 %v33, %v73
  %v114 = vmax.f32 %v34, %v75
  %v115 = vmax.f32 %v35, %v77
  %v116 = vmax.f32 %v36, %v79
  %v117 = vmax.f32 %v37, %v81
  %v118 = vmax.f32 %v38, %v83
  %v119 = vmax.f32 %v39, %v85
  %v120 = vmax.f32 %v40, %v87
  %v121 = vmax.f32 %v41, %v89
  %138 = vrot.lane.b32.xlu0 %v106, 120
  %v139 = vpop.permute.xlu0 %138
  %140 = vrot.lane.b32.xlu0 %v107, 120
  %v141 = vpop.permute.xlu0 %140
  %142 = vrot.lane.b32.xlu0 %v108, 120
  %v143 = vpop.permute.xlu0 %142
  %144 = vrot.lane.b32.xlu0 %v109, 120
  %v145 = vpop.permute.xlu0 %144
  %146 = vrot.lane.b32.xlu0 %v110, 120
  %v147 = vpop.permute.xlu0 %146
  %148 = vrot.lane.b32.xlu0 %v111, 120
  %v149 = vpop.permute.xlu0 %148
  %150 = vrot.lane.b32.xlu0 %v112, 120
  %v151 = vpop.permute.xlu0 %150
  %152 = vrot.lane.b32.xlu0 %v113, 120
  %v153 = vpop.permute.xlu0 %152
  %154 = vrot.lane.b32.xlu0 %v114, 120
  %v155 = vpop.permute.xlu0 %154
  %156 = vrot.lane.b32.xlu0 %v115, 120
  %v157 = vpop.permute.xlu0 %156
  %158 = vrot.lane.b32.xlu0 %v116, 120
  %v159 = vpop.permute.xlu0 %158
  %160 = vrot.lane.b32.xlu0 %v117, 120
  %v161 = vpop.permute.xlu0 %160
  %162 = vrot.lane.b32.xlu0 %v118, 120
  %v163 = vpop.permute.xlu0 %162
  %164 = vrot.lane.b32.xlu0 %v119, 120
  %v165 = vpop.permute.xlu0 %164
  %166 = vrot.lane.b32.xlu0 %v120, 120
  %v167 = vpop.permute.xlu0 %166
  %168 = vrot.lane.b32.xlu0 %v121, 120
  %v169 = vpop.permute.xlu0 %168
  %v186 = vmax.f32 %v106, %v139
  %v187 = vmax.f32 %v107, %v141
  %v188 = vmax.f32 %v108, %v143
  %v189 = vmax.f32 %v109, %v145
  %v190 = vmax.f32 %v110, %v147
  %v191 = vmax.f32 %v111, %v149
  %v192 = vmax.f32 %v112, %v151
  %v193 = vmax.f32 %v113, %v153
  %v194 = vmax.f32 %v114, %v155
  %v195 = vmax.f32 %v115, %v157
  %v196 = vmax.f32 %v116, %v159
  %v197 = vmax.f32 %v117, %v161
  %v198 = vmax.f32 %v118, %v163
  %v199 = vmax.f32 %v119, %v165
  %v200 = vmax.f32 %v120, %v167
  %v201 = vmax.f32 %v121, %v169
  %v218 = vrot.slane %v186, 7
  %v219 = vrot.slane %v187, 7
  %v220 = vrot.slane %v188, 7
  %v221 = vrot.slane %v189, 7
  %v222 = vrot.slane %v190, 7
  %v223 = vrot.slane %v191, 7
  %v224 = vrot.slane %v192, 7
  %v225 = vrot.slane %v193, 7
  %v226 = vrot.slane %v194, 7
  %v227 = vrot.slane %v195, 7
  %v228 = vrot.slane %v196, 7
  %v229 = vrot.slane %v197, 7
  %v230 = vrot.slane %v198, 7
  %v231 = vrot.slane %v199, 7
  %v232 = vrot.slane %v200, 7
  %v233 = vrot.slane %v201, 7
  %vm250 = vcmask 1040384
  %v251 = vsel %vm250, 0.0, %v218
  %v252 = vsel %vm250, 0.0, %v219
  %v253 = vsel %vm250, 0.0, %v220
  %v254 = vsel %vm250, 0.0, %v221
  %v255 = vsel %vm250, 0.0, %v222
  %v256 = vsel %vm250, 0.0, %v223
  %v257 = vsel %vm250, 0.0, %v224
  %v258 = vsel %vm250, 0.0, %v225
  %v259 = vsel %vm250, 0.0, %v226
  %v260 = vsel %vm250, 0.0, %v227
  %v261 = vsel %vm250, 0.0, %v228
  %v262 = vsel %vm250, 0.0, %v229
  %v263 = vsel %vm250, 0.0, %v230
  %v264 = vsel %vm250, 0.0, %v231
  %v265 = vsel %vm250, 0.0, %v232
  %v266 = vsel %vm250, 0.0, %v233
  %v267 = vsel %vm250, %v218, 0.0
  %v268 = vsel %vm250, %v219, 0.0
  %v269 = vsel %vm250, %v220, 0.0
  %v270 = vsel %vm250, %v221, 0.0
  %v271 = vsel %vm250, %v222, 0.0
  %v272 = vsel %vm250, %v223, 0.0
  %v273 = vsel %vm250, %v224, 0.0
  %v274 = vsel %vm250, %v225, 0.0
  %v275 = vsel %vm250, %v226, 0.0
  %v276 = vsel %vm250, %v227, 0.0
  %v277 = vsel %vm250, %v228, 0.0
  %v278 = vsel %vm250, %v229, 0.0
  %v279 = vsel %vm250, %v230, 0.0
  %v280 = vsel %vm250, %v231, 0.0
  %v281 = vsel %vm250, %v232, 0.0
  %v282 = vsel %vm250, %v233, 0.0
  %vm312 = vcmask 1046528
  %v313 = vrot.slane 0.0, 1
  %v314 = vsel %vm312, %v313, %v313
  %v315 = vrot.slane %v251, 1
  %v316 = vrot.slane %v267, 1
  %v317 = vsel %vm312, %v315, %v316
  %v318 = vrot.slane %v252, 1
  %v319 = vrot.slane %v268, 1
  %v320 = vsel %vm312, %v318, %v319
  %v321 = vrot.slane %v253, 1
  %v322 = vrot.slane %v269, 1
  %v323 = vsel %vm312, %v321, %v322
  %v324 = vrot.slane %v254, 1
  %v325 = vrot.slane %v270, 1
  %v326 = vsel %vm312, %v324, %v325
  %v327 = vrot.slane %v255, 1
  %v328 = vrot.slane %v271, 1
  %v329 = vsel %vm312, %v327, %v328
  %v330 = vrot.slane %v256, 1
  %v331 = vrot.slane %v272, 1
  %v332 = vsel %vm312, %v330, %v331
  %v333 = vrot.slane %v257, 1
  %v334 = vrot.slane %v273, 1
  %v335 = vsel %vm312, %v333, %v334
  %v336 = vrot.slane %v259, 1
  %v337 = vrot.slane %v275, 1
  %v338 = vsel %vm312, %v336, %v337
  %v339 = vrot.slane %v260, 1
  %v340 = vrot.slane %v276, 1
  %v341 = vsel %vm312, %v339, %v340
  %v342 = vrot.slane %v261, 1
  %v343 = vrot.slane %v277, 1
  %v344 = vsel %vm312, %v342, %v343
  %v345 = vrot.slane %v262, 1
  %v346 = vrot.slane %v278, 1
  %v347 = vsel %vm312, %v345, %v346
  %v348 = vrot.slane %v263, 1
  %v349 = vrot.slane %v279, 1
  %v350 = vsel %vm312, %v348, %v349
  %v351 = vrot.slane %v264, 1
  %v352 = vrot.slane %v280, 1
  %v353 = vsel %vm312, %v351, %v352
  %v354 = vrot.slane %v265, 1
  %v355 = vrot.slane %v281, 1
  %v356 = vsel %vm312, %v354, %v355
  %357 = vrot.lane.b32.xlu0 %v314, 4
  %v358 = vpop.permute.xlu0 %357
  %359 = vrot.lane.b32.xlu0 %v317, 4
  %v360 = vpop.permute.xlu0 %359
  %361 = vrot.lane.b32.xlu0 %v320, 4
  %v362 = vpop.permute.xlu0 %361
  %363 = vrot.lane.b32.xlu0 %v323, 4
  %v364 = vpop.permute.xlu0 %363
  %365 = vrot.lane.b32.xlu0 %v326, 4
  %v366 = vpop.permute.xlu0 %365
  %367 = vrot.lane.b32.xlu0 %v329, 4
  %v368 = vpop.permute.xlu0 %367
  %369 = vrot.lane.b32.xlu0 %v332, 4
  %v370 = vpop.permute.xlu0 %369
  %371 = vrot.lane.b32.xlu0 %v335, 4
  %v372 = vpop.permute.xlu0 %371
  %373 = vrot.lane.b32.xlu0 %v338, 4
  %v374 = vpop.permute.xlu0 %373
  %375 = vrot.lane.b32.xlu0 %v341, 4
  %v376 = vpop.permute.xlu0 %375
  %377 = vrot.lane.b32.xlu0 %v344, 4
  %v378 = vpop.permute.xlu0 %377
  %379 = vrot.lane.b32.xlu0 %v347, 4
  %v380 = vpop.permute.xlu0 %379
  %381 = vrot.lane.b32.xlu0 %v350, 4
  %v382 = vpop.permute.xlu0 %381
  %383 = vrot.lane.b32.xlu0 %v353, 4
  %v384 = vpop.permute.xlu0 %383
  %385 = vrot.lane.b32.xlu0 %v356, 4
  %v386 = vpop.permute.xlu0 %385
  %vm402 = vcmask 1045504
  %v403 = vrot.slane 0.0, 2
  %v404 = vsel %vm402, %v403, %v403
  %v405 = vrot.slane %v251, 2
  %v406 = vrot.slane %v267, 2
  %v407 = vsel %vm402, %v405, %v406
  %v408 = vrot.slane %v252, 2
  %v409 = vrot.slane %v268, 2
  %v410 = vsel %vm402, %v408, %v409
  %v411 = vrot.slane %v253, 2
  %v412 = vrot.slane %v269, 2
  %v413 = vsel %vm402, %v411, %v412
  %v414 = vrot.slane %v254, 2
  %v415 = vrot.slane %v270, 2
  %v416 = vsel %vm402, %v414, %v415
  %v417 = vrot.slane %v255, 2
  %v418 = vrot.slane %v271, 2
  %v419 = vsel %vm402, %v417, %v418
  %v420 = vrot.slane %v256, 2
  %v421 = vrot.slane %v272, 2
  %v422 = vsel %vm402, %v420, %v421
  %v423 = vrot.slane %v257, 2
  %v424 = vrot.slane %v273, 2
  %v425 = vsel %vm402, %v423, %v424
  %v426 = vrot.slane %v259, 2
  %v427 = vrot.slane %v275, 2
  %v428 = vsel %vm402, %v426, %v427
  %v429 = vrot.slane %v260, 2
  %v430 = vrot.slane %v276, 2
  %v431 = vsel %vm402, %v429, %v430
  %v432 = vrot.slane %v261, 2
  %v433 = vrot.slane %v277, 2
  %v434 = vsel %vm402, %v432, %v433
  %v435 = vrot.slane %v262, 2
  %v436 = vrot.slane %v278, 2
  %v437 = vsel %vm402, %v435, %v436
  %v438 = vrot.slane %v263, 2
  %v439 = vrot.slane %v279, 2
  %v440 = vsel %vm402, %v438, %v439
  %v441 = vrot.slane %v264, 2
  %v442 = vrot.slane %v280, 2
  %v443 = vsel %vm402, %v441, %v442
  %v444 = vrot.slane %v265, 2
  %v445 = vrot.slane %v281, 2
  %v446 = vsel %vm402, %v444, %v445
  %447 = vrot.lane.b32.xlu0 %v404, 8
  %v448 = vpop.permute.xlu0 %447
  %449 = vrot.lane.b32.xlu0 %v407, 8
  %v450 = vpop.permute.xlu0 %449
  %451 = vrot.lane.b32.xlu0 %v410, 8
  %v452 = vpop.permute.xlu0 %451
  %453 = vrot.lane.b32.xlu0 %v413, 8
  %v454 = vpop.permute.xlu0 %453
  %455 = vrot.lane.b32.xlu0 %v416, 8
  %v456 = vpop.permute.xlu0 %455
  %457 = vrot.lane.b32.xlu0 %v419, 8
  %v458 = vpop.permute.xlu0 %457
  %459 = vrot.lane.b32.xlu0 %v422, 8
  %v460 = vpop.permute.xlu0 %459
  %461 = vrot.lane.b32.xlu0 %v425, 8
  %v462 = vpop.permute.xlu0 %461
  %463 = vrot.lane.b32.xlu0 %v428, 8
  %v464 = vpop.permute.xlu0 %463
  %465 = vrot.lane.b32.xlu0 %v431, 8
  %v466 = vpop.permute.xlu0 %465
  %467 = vrot.lane.b32.xlu0 %v434, 8
  %v468 = vpop.permute.xlu0 %467
  %469 = vrot.lane.b32.xlu0 %v437, 8
  %v470 = vpop.permute.xlu0 %469
  %471 = vrot.lane.b32.xlu0 %v440, 8
  %v472 = vpop.permute.xlu0 %471
  %473 = vrot.lane.b32.xlu0 %v443, 8
  %v474 = vpop.permute.xlu0 %473
  %475 = vrot.lane.b32.xlu0 %v446, 8
  %v476 = vpop.permute.xlu0 %475
  %494 = vrot.lane.b32.xlu0 %v251, 12
  %v495 = vpop.permute.xlu0 %494
  %496 = vrot.lane.b32.xlu0 %v252, 12
  %v497 = vpop.permute.xlu0 %496
  %498 = vrot.lane.b32.xlu0 %v253, 12
  %v499 = vpop.permute.xlu0 %498
  %500 = vrot.lane.b32.xlu0 %v254, 12
  %v501 = vpop.permute.xlu0 %500
  %502 = vrot.lane.b32.xlu0 %v255, 12
  %v503 = vpop.permute.xlu0 %502
  %504 = vrot.lane.b32.xlu0 %v256, 12
  %v505 = vpop.permute.xlu0 %504
  %506 = vrot.lane.b32.xlu0 %v257, 12
  %v507 = vpop.permute.xlu0 %506
  %508 = vrot.lane.b32.xlu0 %v258, 12
  %v509 = vpop.permute.xlu0 %508
  %510 = vrot.lane.b32.xlu0 %v259, 12
  %v511 = vpop.permute.xlu0 %510
  %512 = vrot.lane.b32.xlu0 %v260, 12
  %v513 = vpop.permute.xlu0 %512
  %514 = vrot.lane.b32.xlu0 %v261, 12
  %v515 = vpop.permute.xlu0 %514
  %516 = vrot.lane.b32.xlu0 %v262, 12
  %v517 = vpop.permute.xlu0 %516
  %518 = vrot.lane.b32.xlu0 %v263, 12
  %v519 = vpop.permute.xlu0 %518
  %520 = vrot.lane.b32.xlu0 %v264, 12
  %v521 = vpop.permute.xlu0 %520
  %522 = vrot.lane.b32.xlu0 %v265, 12
  %v523 = vpop.permute.xlu0 %522
  %524 = vrot.lane.b32.xlu0 %v266, 12
  %v525 = vpop.permute.xlu0 %524
  %v544 = vrot.slane %v258, 1
  %v545 = vrot.slane %v274, 1
  %v546 = vsel %vm312, %v544, %v545
  %v547 = vrot.slane %v266, 1
  %v548 = vrot.slane %v282, 1
  %v549 = vsel %vm312, %v547, %v548
  %550 = vrot.lane.b32.xlu0 %v317, 16
  %v551 = vpop.permute.xlu0 %550
  %552 = vrot.lane.b32.xlu0 %v320, 16
  %v553 = vpop.permute.xlu0 %552
  %554 = vrot.lane.b32.xlu0 %v323, 16
  %v555 = vpop.permute.xlu0 %554
  %556 = vrot.lane.b32.xlu0 %v326, 16
  %v557 = vpop.permute.xlu0 %556
  %558 = vrot.lane.b32.xlu0 %v329, 16
  %v559 = vpop.permute.xlu0 %558
  %560 = vrot.lane.b32.xlu0 %v332, 16
  %v561 = vpop.permute.xlu0 %560
  %562 = vrot.lane.b32.xlu0 %v335, 16
  %v563 = vpop.permute.xlu0 %562
  %564 = vrot.lane.b32.xlu0 %v546, 16
  %v565 = vpop.permute.xlu0 %564
  %566 = vrot.lane.b32.xlu0 %v338, 16
  %v567 = vpop.permute.xlu0 %566
  %568 = vrot.lane.b32.xlu0 %v341, 16
  %v569 = vpop.permute.xlu0 %568
  %570 = vrot.lane.b32.xlu0 %v344, 16
  %v571 = vpop.permute.xlu0 %570
  %572 = vrot.lane.b32.xlu0 %v347, 16
  %v573 = vpop.permute.xlu0 %572
  %574 = vrot.lane.b32.xlu0 %v350, 16
  %v575 = vpop.permute.xlu0 %574
  %576 = vrot.lane.b32.xlu0 %v353, 16
  %v577 = vpop.permute.xlu0 %576
  %578 = vrot.lane.b32.xlu0 %v356, 16
  %v579 = vpop.permute.xlu0 %578
  %580 = vrot.lane.b32.xlu0 %v549, 16
  %v581 = vpop.permute.xlu0 %580
  %v598 = vrot.slane %v258, 2
  %v599 = vrot.slane %v274, 2
  %v600 = vsel %vm402, %v598, %v599
  %v601 = vrot.slane %v266, 2
  %v602 = vrot.slane %v282, 2
  %v603 = vsel %vm402, %v601, %v602
  %604 = vrot.lane.b32.xlu0 %v407, 20
  %v605 = vpop.permute.xlu0 %604
  %606 = vrot.lane.b32.xlu0 %v410, 20
  %v607 = vpop.permute.xlu0 %606
  %608 = vrot.lane.b32.xlu0 %v413, 20
  %v609 = vpop.permute.xlu0 %608
  %610 = vrot.lane.b32.xlu0 %v416, 20
  %v611 = vpop.permute.xlu0 %610
  %612 = vrot.lane.b32.xlu0 %v419, 20
  %v613 = vpop.permute.xlu0 %612
  %614 = vrot.lane.b32.xlu0 %v422, 20
  %v615 = vpop.permute.xlu0 %614
  %616 = vrot.lane.b32.xlu0 %v425, 20
  %v617 = vpop.permute.xlu0 %616
  %618 = vrot.lane.b32.xlu0 %v600, 20
  %v619 = vpop.permute.xlu0 %618
  %620 = vrot.lane.b32.xlu0 %v428, 20
  %v621 = vpop.permute.xlu0 %620
  %622 = vrot.lane.b32.xlu0 %v431, 20
  %v623 = vpop.permute.xlu0 %622
  %624 = vrot.lane.b32.xlu0 %v434, 20
  %v625 = vpop.permute.xlu0 %624
  %626 = vrot.lane.b32.xlu0 %v437, 20
  %v627 = vpop.permute.xlu0 %626
  %628 = vrot.lane.b32.xlu0 %v440, 20
  %v629 = vpop.permute.xlu0 %628
  %630 = vrot.lane.b32.xlu0 %v443, 20
  %v631 = vpop.permute.xlu0 %630
  %632 = vrot.lane.b32.xlu0 %v446, 20
  %v633 = vpop.permute.xlu0 %632
  %634 = vrot.lane.b32.xlu0 %v603, 20
  %v635 = vpop.permute.xlu0 %634
  %652 = vrot.lane.b32.xlu0 %v252, 24
  %v653 = vpop.permute.xlu0 %652
  %654 = vrot.lane.b32.xlu0 %v253, 24
  %v655 = vpop.permute.xlu0 %654
  %656 = vrot.lane.b32.xlu0 %v254, 24
  %v657 = vpop.permute.xlu0 %656
  %658 = vrot.lane.b32.xlu0 %v255, 24
  %v659 = vpop.permute.xlu0 %658
  %660 = vrot.lane.b32.xlu0 %v256, 24
  %v661 = vpop.permute.xlu0 %660
  %662 = vrot.lane.b32.xlu0 %v257, 24
  %v663 = vpop.permute.xlu0 %662
  %664 = vrot.lane.b32.xlu0 %v258, 24
  %v665 = vpop.permute.xlu0 %664
  %666 = vrot.lane.b32.xlu0 0.0, 24
  %v667 = vpop.permute.xlu0 %666
  %668 = vrot.lane.b32.xlu0 %v260, 24
  %v669 = vpop.permute.xlu0 %668
  %670 = vrot.lane.b32.xlu0 %v261, 24
  %v671 = vpop.permute.xlu0 %670
  %672 = vrot.lane.b32.xlu0 %v262, 24
  %v673 = vpop.permute.xlu0 %672
  %674 = vrot.lane.b32.xlu0 %v263, 24
  %v675 = vpop.permute.xlu0 %674
  %676 = vrot.lane.b32.xlu0 %v264, 24
  %v677 = vpop.permute.xlu0 %676
  %678 = vrot.lane.b32.xlu0 %v265, 24
  %v679 = vpop.permute.xlu0 %678
  %680 = vrot.lane.b32.xlu0 %v266, 24
  %v681 = vpop.permute.xlu0 %680
  %697 = vrot.lane.b32.xlu0 %v320, 28
  %v698 = vpop.permute.xlu0 %697
  %699 = vrot.lane.b32.xlu0 %v323, 28
  %v700 = vpop.permute.xlu0 %699
  %701 = vrot.lane.b32.xlu0 %v326, 28
  %v702 = vpop.permute.xlu0 %701
  %703 = vrot.lane.b32.xlu0 %v329, 28
  %v704 = vpop.permute.xlu0 %703
  %705 = vrot.lane.b32.xlu0 %v332, 28
  %v706 = vpop.permute.xlu0 %705
  %707 = vrot.lane.b32.xlu0 %v335, 28
  %v708 = vpop.permute.xlu0 %707
  %709 = vrot.lane.b32.xlu0 %v546, 28
  %v710 = vpop.permute.xlu0 %709
  %711 = vrot.lane.b32.xlu0 %v314, 28
  %v712 = vpop.permute.xlu0 %711
  %713 = vrot.lane.b32.xlu0 %v341, 28
  %v714 = vpop.permute.xlu0 %713
  %715 = vrot.lane.b32.xlu0 %v344, 28
  %v716 = vpop.permute.xlu0 %715
  %717 = vrot.lane.b32.xlu0 %v347, 28
  %v718 = vpop.permute.xlu0 %717
  %719 = vrot.lane.b32.xlu0 %v350, 28
  %v720 = vpop.permute.xlu0 %719
  %721 = vrot.lane.b32.xlu0 %v353, 28
  %v722 = vpop.permute.xlu0 %721
  %723 = vrot.lane.b32.xlu0 %v356, 28
  %v724 = vpop.permute.xlu0 %723
  %725 = vrot.lane.b32.xlu0 %v549, 28
  %v726 = vpop.permute.xlu0 %725
  %742 = vrot.lane.b32.xlu0 %v410, 32
  %v743 = vpop.permute.xlu0 %742
  %744 = vrot.lane.b32.xlu0 %v413, 32
  %v745 = vpop.permute.xlu0 %744
  %746 = vrot.lane.b32.xlu0 %v416, 32
  %v747 = vpop.permute.xlu0 %746
  %748 = vrot.lane.b32.xlu0 %v419, 32
  %v749 = vpop.permute.xlu0 %748
  %750 = vrot.lane.b32.xlu0 %v422, 32
  %v751 = vpop.permute.xlu0 %750
  %752 = vrot.lane.b32.xlu0 %v425, 32
  %v753 = vpop.permute.xlu0 %752
  %754 = vrot.lane.b32.xlu0 %v600, 32
  %v755 = vpop.permute.xlu0 %754
  %756 = vrot.lane.b32.xlu0 %v404, 32
  %v757 = vpop.permute.xlu0 %756
  %758 = vrot.lane.b32.xlu0 %v431, 32
  %v759 = vpop.permute.xlu0 %758
  %760 = vrot.lane.b32.xlu0 %v434, 32
  %v761 = vpop.permute.xlu0 %760
  %762 = vrot.lane.b32.xlu0 %v437, 32
  %v763 = vpop.permute.xlu0 %762
  %764 = vrot.lane.b32.xlu0 %v440, 32
  %v765 = vpop.permute.xlu0 %764
  %766 = vrot.lane.b32.xlu0 %v443, 32
  %v767 = vpop.permute.xlu0 %766
  %768 = vrot.lane.b32.xlu0 %v446, 32
  %v769 = vpop.permute.xlu0 %768
  %770 = vrot.lane.b32.xlu0 %v603, 32
  %v771 = vpop.permute.xlu0 %770
  %vm787 = vcmask 31744
  %v788 = vsel %vm787, 0.0, %v358
  %v789 = vsel %vm787, %v251, %v360
  %v790 = vsel %vm787, %v252, %v362
  %v791 = vsel %vm787, %v253, %v364
  %v792 = vsel %vm787, %v254, %v366
  %v793 = vsel %vm787, %v255, %v368
  %v794 = vsel %vm787, %v256, %v370
  %v795 = vsel %vm787, %v257, %v372
  %v796 = vsel %vm787, %v259, %v374
  %v797 = vsel %vm787, %v260, %v376
  %v798 = vsel %vm787, %v261, %v378
  %v799 = vsel %vm787, %v262, %v380
  %v800 = vsel %vm787, %v263, %v382
  %v801 = vsel %vm787, %v264, %v384
  %v802 = vsel %vm787, %v265, %v386
  %vm803 = vcmask 64512
  %v804 = vsel %vm803, %v788, %v448
  %v805 = vsel %vm803, %v789, %v450
  %v806 = vsel %vm803, %v790, %v452
  %v807 = vsel %vm803, %v791, %v454
  %v808 = vsel %vm803, %v792, %v456
  %v809 = vsel %vm803, %v793, %v458
  %v810 = vsel %vm803, %v794, %v460
  %v811 = vsel %vm803, %v795, %v462
  %v812 = vsel %vm803, %v796, %v464
  %v813 = vsel %vm803, %v797, %v466
  %v814 = vsel %vm803, %v798, %v468
  %v815 = vsel %vm803, %v799, %v470
  %v816 = vsel %vm803, %v800, %v472
  %v817 = vsel %vm803, %v801, %v474
  %v818 = vsel %vm803, %v802, %v476
  %vm819 = vcmask 97280
  %v820 = vsel %vm819, %v804, %v495
  %v821 = vsel %vm819, %v805, %v497
  %v822 = vsel %vm819, %v806, %v499
  %v823 = vsel %vm819, %v807, %v501
  %v824 = vsel %vm819, %v808, %v503
  %v825 = vsel %vm819, %v809, %v505
  %v826 = vsel %vm819, %v810, %v507
  %v827 = vsel %vm819, %v811, %v509
  %v828 = vsel %vm819, %v804, %v511
  %v829 = vsel %vm819, %v812, %v513
  %v830 = vsel %vm819, %v813, %v515
  %v831 = vsel %vm819, %v814, %v517
  %v832 = vsel %vm819, %v815, %v519
  %v833 = vsel %vm819, %v816, %v521
  %v834 = vsel %vm819, %v817, %v523
  %v835 = vsel %vm819, %v818, %v525
  %vm836 = vcmask 130048
  %v837 = vsel %vm836, %v820, %v551
  %v838 = vsel %vm836, %v821, %v553
  %v839 = vsel %vm836, %v822, %v555
  %v840 = vsel %vm836, %v823, %v557
  %v841 = vsel %vm836, %v824, %v559
  %v842 = vsel %vm836, %v825, %v561
  %v843 = vsel %vm836, %v826, %v563
  %v844 = vsel %vm836, %v827, %v565
  %v845 = vsel %vm836, %v828, %v567
  %v846 = vsel %vm836, %v829, %v569
  %v847 = vsel %vm836, %v830, %v571
  %v848 = vsel %vm836, %v831, %v573
  %v849 = vsel %vm836, %v832, %v575
  %v850 = vsel %vm836, %v833, %v577
  %v851 = vsel %vm836, %v834, %v579
  %v852 = vsel %vm836, %v835, %v581
  %vm853 = vcmask 162816
  %v854 = vsel %vm853, %v837, %v605
  %v855 = vsel %vm853, %v838, %v607
  %v856 = vsel %vm853, %v839, %v609
  %v857 = vsel %vm853, %v840, %v611
  %v858 = vsel %vm853, %v841, %v613
  %v859 = vsel %vm853, %v842, %v615
  %v860 = vsel %vm853, %v843, %v617
  %v861 = vsel %vm853, %v844, %v619
  %v862 = vsel %vm853, %v845, %v621
  %v863 = vsel %vm853, %v846, %v623
  %v864 = vsel %vm853, %v847, %v625
  %v865 = vsel %vm853, %v848, %v627
  %v866 = vsel %vm853, %v849, %v629
  %v867 = vsel %vm853, %v850, %v631
  %v868 = vsel %vm853, %v851, %v633
  %v869 = vsel %vm853, %v852, %v635
  %vm870 = vcmask 195584
  %v871 = vsel %vm870, %v854, %v653
  %v872 = vsel %vm870, %v855, %v655
  %v873 = vsel %vm870, %v856, %v657
  %v874 = vsel %vm870, %v857, %v659
  %v875 = vsel %vm870, %v858, %v661
  %v876 = vsel %vm870, %v859, %v663
  %v877 = vsel %vm870, %v860, %v665
  %v878 = vsel %vm870, %v861, %v667
  %v879 = vsel %vm870, %v862, %v669
  %v880 = vsel %vm870, %v863, %v671
  %v881 = vsel %vm870, %v864, %v673
  %v882 = vsel %vm870, %v865, %v675
  %v883 = vsel %vm870, %v866, %v677
  %v884 = vsel %vm870, %v867, %v679
  %v885 = vsel %vm870, %v868, %v681
  %v886 = vsel %vm870, %v869, %v667
  %vm887 = vcmask 228352
  %v888 = vsel %vm887, %v871, %v698
  %v889 = vsel %vm887, %v872, %v700
  %v890 = vsel %vm887, %v873, %v702
  %v891 = vsel %vm887, %v874, %v704
  %v892 = vsel %vm887, %v875, %v706
  %v893 = vsel %vm887, %v876, %v708
  %v894 = vsel %vm887, %v877, %v710
  %v895 = vsel %vm887, %v878, %v712
  %v896 = vsel %vm887, %v879, %v714
  %v897 = vsel %vm887, %v880, %v716
  %v898 = vsel %vm887, %v881, %v718
  %v899 = vsel %vm887, %v882, %v720
  %v900 = vsel %vm887, %v883, %v722
  %v901 = vsel %vm887, %v884, %v724
  %v902 = vsel %vm887, %v885, %v726
  %v903 = vsel %vm887, %v886, %v712
  %vm904 = vcmask 261120
  %v905 = vsel %vm904, %v888, %v743
  %v906 = vsel %vm904, %v889, %v745
  %v907 = vsel %vm904, %v890, %v747
  %v908 = vsel %vm904, %v891, %v749
  %v909 = vsel %vm904, %v892, %v751
  %v910 = vsel %vm904, %v893, %v753
  %v911 = vsel %vm904, %v894, %v755
  %v912 = vsel %vm904, %v895, %v757
  %v913 = vsel %vm904, %v896, %v759
  %v914 = vsel %vm904, %v897, %v761
  %v915 = vsel %vm904, %v898, %v763
  %v916 = vsel %vm904, %v899, %v765
  %v917 = vsel %vm904, %v900, %v767
  %v918 = vsel %vm904, %v901, %v769
  %v919 = vsel %vm904, %v902, %v771
  %v920 = vsel %vm904, %v903, %v757
  %v921 = vld [vmem:[%s1] sm:$0xff]
  %v922 = vld [vmem:[%s1 + $0x8] sm:$0xff]
  %v923 = vld [vmem:[%s1 + $0x10] sm:$0xff]
  %v924 = vld [vmem:[%s1 + $0x18] sm:$0xff]
  %v925 = vld [vmem:[%s1 + $0x20] sm:$0xf]
  %vm926 = vcmask 293888
  %v928 = vsel %vm926, %v905, 0
  %v931 = vsel %vm926, %v906, 0
  %v934 = vsel %vm926, %v907, 0
  %v937 = vsel %vm926, %v908, 0
  %v940 = vsel %vm926, %v909, 0
  %v943 = vsel %vm926, %v910, 0
  %v946 = vsel %vm926, %v911, 0
  %v949 = vsel %vm926, %v912, 0
  %v952 = vsel %vm926, %v913, 0
  %v955 = vsel %vm926, %v914, 0
  %v958 = vsel %vm926, %v915, 0
  %v961 = vsel %vm926, %v916, 0
  %v964 = vsel %vm926, %v917, 0
  %v967 = vsel %vm926, %v918, 0
  %v970 = vsel %vm926, %v919, 0
  %v973 = vsel %vm926, %v920, 0
  %vm975 = vcmask 1043456
  %v977 = vsel %vm975, %v925, 0
  %979 = vmatprep.subr.mxu0 0.0
  %980 = vmatpush1.msra.mxu0 0.0
  %981 = vmatprep.subr.mxu0 0.0
  %982 = vmatpush1.msra.mxu0 0.0
  %983 = vmatprep.subr.mxu0 0.0
  %984 = vmatpush1.msra.mxu0 0.0
  %985 = vmatprep.subr.mxu0 0.0
  %986 = vmatpush1.msra.mxu0 0.0
  %987 = vmatprep.subr.mxu0 0.0
  %988 = vmatpush1.msra.mxu0 0.0
  %989 = vmatprep.subr.mxu0 0.0
  %990 = vmatpush1.msra.mxu0 0.0
  %991 = vmatprep.subr.mxu0 0.0
  %992 = vmatpush1.msra.mxu0 0.0
  %993 = vmatprep.subr.mxu0 0.0
  %994 = vmatpush1.msra.mxu0 0.0
  %995 = vmatprep.subr.mxu0 0.0
  %996 = vmatpush1.msra.mxu0 0.0
  %997 = vmatprep.subr.mxu0 0.0
  %998 = vmatpush1.msra.mxu0 0.0
  %999 = vmatprep.subr.mxu0 0.0
  %1000 = vmatpush1.msra.mxu0 0.0
  %1001 = vmatprep.subr.mxu0 0.0
  %1002 = vmatpush1.msra.mxu0 %v977
  %1003 = vmatprep.subr.mxu0 0.0
  %1004 = vmatpush1.msra.mxu0 %v924
  %1005 = vmatprep.subr.mxu0 0.0
  %1006 = vmatpush1.msra.mxu0 %v923
  %1007 = vmatprep.subr.mxu0 0.0
  %1008 = vmatpush1.msra.mxu0 %v922
  %1009 = vmatprep.subr.mxu0 0.0
  %1010 = vmatpush1.msra.mxu0 %v921
  %1011 = vmatprep.subr.mxu0 0.0
  %1012 = vmatpush2.msra.mxu0 0.0
  %1013 = vmatprep.subr.mxu0 0.0
  %1014 = vmatpush2.msra.mxu0 0.0
  %1015 = vmatprep.subr.mxu0 0.0
  %1016 = vmatpush2.msra.mxu0 0.0
  %1017 = vmatprep.subr.mxu0 0.0
  %1018 = vmatpush2.msra.mxu0 0.0
  %1019 = vmatprep.subr.mxu0 0.0
  %1020 = vmatpush2.msra.mxu0 0.0
  %1021 = vmatprep.subr.mxu0 0.0
  %1022 = vmatpush2.msra.mxu0 0.0
  %1023 = vmatprep.subr.mxu0 0.0
  %1024 = vmatpush2.msra.mxu0 0.0
  %1025 = vmatprep.subr.mxu0 0.0
  %1026 = vmatpush2.msra.mxu0 0.0
  %1027 = vmatprep.subr.mxu0 0.0
  %1028 = vmatpush2.msra.mxu0 0.0
  %1029 = vmatprep.subr.mxu0 0.0
  %1030 = vmatpush2.msra.mxu0 0.0
  %1031 = vmatprep.subr.mxu0 0.0
  %1032 = vmatpush2.msra.mxu0 0.0
  %1033 = vmatprep.subr.mxu0 0.0
  %1034 = vmatpush2.msra.mxu0 0.0
  %1035 = vmatprep.subr.mxu0 0.0
  %1036 = vmatpush2.msra.mxu0 0.0
  %1037 = vmatprep.subr.mxu0 0.0
  %1038 = vmatpush2.msra.mxu0 0.0
  %1039 = vmatprep.subr.mxu0 0.0
  %1040 = vmatpush2.msra.mxu0 0.0
  %1041 = vmatprep.subr.mxu0 0.0
  %1042 = vmatpush2.msra.mxu0 0.0
  %1043 = vmatprep.mubr.f32.mxu0 0.0
  %1044 = vmatmul.mubr.f32.gmra.mxu0 %v928
  %v1045 = vpop.f32.mrf.mxu0
  %v1046 = vadd.f32 0.0, %v1045
  %v1047 = vpop.f32.mrf.mxu0
  %1048 = vmatprep.mubr.f32.mxu0 0.0
  %1049 = vmatmul.mubr.f32.gmra.mxu0 %v931
  %v1050 = vpop.f32.mrf.mxu0
  %v1051 = vadd.f32 0.0, %v1050
  %v1052 = vpop.f32.mrf.mxu0
  %1053 = vmatprep.mubr.f32.mxu0 0.0
  %1054 = vmatmul.mubr.f32.gmra.mxu0 %v934
  %v1055 = vpop.f32.mrf.mxu0
  %v1056 = vadd.f32 0.0, %v1055
  %v1057 = vpop.f32.mrf.mxu0
  %1058 = vmatprep.mubr.f32.mxu0 0.0
  %1059 = vmatmul.mubr.f32.gmra.mxu0 %v937
  %v1060 = vpop.f32.mrf.mxu0
  %v1061 = vadd.f32 0.0, %v1060
  %v1062 = vpop.f32.mrf.mxu0
  %1063 = vmatprep.mubr.f32.mxu0 0.0
  %1064 = vmatmul.mubr.f32.gmra.mxu0 %v940
  %v1065 = vpop.f32.mrf.mxu0
  %v1066 = vadd.f32 0.0, %v1065
  %v1067 = vpop.f32.mrf.mxu0
  %1068 = vmatprep.mubr.f32.mxu0 0.0
  %1069 = vmatmul.mubr.f32.gmra.mxu0 %v943
  %v1070 = vpop.f32.mrf.mxu0
  %v1071 = vadd.f32 0.0, %v1070
  %v1072 = vpop.f32.mrf.mxu0
  %1073 = vmatprep.mubr.f32.mxu0 0.0
  %1074 = vmatmul.mubr.f32.gmra.mxu0 %v946
  %v1075 = vpop.f32.mrf.mxu0
  %v1076 = vadd.f32 0.0, %v1075
  %v1077 = vpop.f32.mrf.mxu0
  %1078 = vmatprep.mubr.f32.mxu0 0.0
  %1079 = vmatmul.mubr.f32.gmra.mxu0 %v949
  %v1080 = vpop.f32.mrf.mxu0
  %v1081 = vadd.f32 0.0, %v1080
  %v1082 = vpop.f32.mrf.mxu0
  %1083 = vmatprep.mubr.f32.mxu0 0.0
  %1084 = vmatmul.mubr.f32.gmra.mxu0 %v952
  %v1085 = vpop.f32.mrf.mxu0
  %v1086 = vadd.f32 0.0, %v1085
  %v1087 = vpop.f32.mrf.mxu0
  %1088 = vmatprep.mubr.f32.mxu0 0.0
  %1089 = vmatmul.mubr.f32.gmra.mxu0 %v955
  %v1090 = vpop.f32.mrf.mxu0
  %v1091 = vadd.f32 0.0, %v1090
  %v1092 = vpop.f32.mrf.mxu0
  %1093 = vmatprep.mubr.f32.mxu0 0.0
  %1094 = vmatmul.mubr.f32.gmra.mxu0 %v958
  %v1095 = vpop.f32.mrf.mxu0
  %v1096 = vadd.f32 0.0, %v1095
  %v1097 = vpop.f32.mrf.mxu0
  %1098 = vmatprep.mubr.f32.mxu0 0.0
  %1099 = vmatmul.mubr.f32.gmra.mxu0 %v961
  %v1100 = vpop.f32.mrf.mxu0
  %v1101 = vadd.f32 0.0, %v1100
  %v1102 = vpop.f32.mrf.mxu0
  %1103 = vmatprep.mubr.f32.mxu0 0.0
  %1104 = vmatmul.mubr.f32.gmra.mxu0 %v964
  %v1105 = vpop.f32.mrf.mxu0
  %v1106 = vadd.f32 0.0, %v1105
  %v1107 = vpop.f32.mrf.mxu0
  %1108 = vmatprep.mubr.f32.mxu0 0.0
  %1109 = vmatmul.mubr.f32.gmra.mxu0 %v967
  %v1110 = vpop.f32.mrf.mxu0
  %v1111 = vadd.f32 0.0, %v1110
  %v1112 = vpop.f32.mrf.mxu0
  %1113 = vmatprep.mubr.f32.mxu0 0.0
  %1114 = vmatmul.mubr.f32.gmra.mxu0 %v970
  %v1115 = vpop.f32.mrf.mxu0
  %v1116 = vadd.f32 0.0, %v1115
  %v1117 = vpop.f32.mrf.mxu0
  %1118 = vmatprep.mubr.f32.mxu0 0.0
  %1119 = vmatmul.mubr.f32.gmra.mxu0 %v973
  %v1120 = vpop.f32.mrf.mxu0
  %v1121 = vadd.f32 0.0, %v1120
  %v1122 = vpop.f32.mrf.mxu0
  %1123 = vdwg.mxu0
  %v1124 = vsel %vm803, %v1046, 0.0
  %v1125 = vsel %vm803, %v1051, 0.0
  %v1126 = vadd.f32 %v1124, %v1125
  %v1127 = vsel %vm803, %v1056, 0.0
  %v1128 = vadd.f32 %v1126, %v1127
  %v1129 = vsel %vm803, %v1061, 0.0
  %v1130 = vadd.f32 %v1128, %v1129
  %v1131 = vsel %vm803, %v1066, 0.0
  %v1132 = vadd.f32 %v1130, %v1131
  %v1133 = vsel %vm803, %v1071, 0.0
  %v1134 = vadd.f32 %v1132, %v1133
  %v1135 = vsel %vm803, %v1076, 0.0
  %v1136 = vadd.f32 %v1134, %v1135
  %v1137 = vsel %vm803, %v1081, 0.0
  %v1138 = vadd.f32 %v1136, %v1137
  %v1139 = vsel %vm803, %v1086, 0.0
  %v1140 = vadd.f32 %v1138, %v1139
  %v1141 = vsel %vm803, %v1091, 0.0
  %v1142 = vadd.f32 %v1140, %v1141
  %v1143 = vsel %vm803, %v1096, 0.0
  %v1144 = vadd.f32 %v1142, %v1143
  %v1145 = vsel %vm803, %v1101, 0.0
  %v1146 = vadd.f32 %v1144, %v1145
  %v1147 = vsel %vm803, %v1106, 0.0
  %v1148 = vadd.f32 %v1146, %v1147
  %v1149 = vsel %vm803, %v1111, 0.0
  %v1150 = vadd.f32 %v1148, %v1149
  %v1151 = vsel %vm803, %v1116, 0.0
  %v1152 = vadd.f32 %v1150, %v1151
  %v1153 = vsel %vm803, %v1121, 0.0
  %v1154 = vadd.f32 %v1152, %v1153
  %v1155 = vrot.slane %v1154, 4
  %v1156 = vadd.f32 %v1154, %v1155
  %v1157 = vrot.slane %v1156, 2
  %v1158 = vadd.f32 %v1156, %v1157
  %v1159 = vrot.slane %v1158, 1
  %v1160 = vadd.f32 %v1158, %v1159
  %v1161 = vrcp.pop 128.0
  %v1162 = vmul.f32 %v1160, %v1161
  %v1163 = vsub.f32 %v1046, %v1162
  %v1164 = vsub.f32 %v1051, %v1162
  %v1165 = vsub.f32 %v1056, %v1162
  %v1166 = vsub.f32 %v1061, %v1162
  %v1167 = vsub.f32 %v1066, %v1162
  %v1168 = vsub.f32 %v1071, %v1162
  %v1169 = vsub.f32 %v1076, %v1162
  %v1170 = vsub.f32 %v1081, %v1162
  %v1171 = vsub.f32 %v1086, %v1162
  %v1172 = vsub.f32 %v1091, %v1162
  %v1173 = vsub.f32 %v1096, %v1162
  %v1174 = vsub.f32 %v1101, %v1162
  %v1175 = vsub.f32 %v1106, %v1162
  %v1176 = vsub.f32 %v1111, %v1162
  %v1177 = vsub.f32 %v1116, %v1162
  %v1178 = vsub.f32 %v1121, %v1162
  %v1179 = vmul.f32 %v1163, %v1163
  %v1180 = vmul.f32 %v1164, %v1164
  %v1181 = vmul.f32 %v1165, %v1165
  %v1182 = vmul.f32 %v1166, %v1166
  %v1183 = vmul.f32 %v1167, %v1167
  %v1184 = vmul.f32 %v1168, %v1168
  %v1185 = vmul.f32 %v1169, %v1169
  %v1186 = vmul.f32 %v1170, %v1170
  %v1187 = vmul.f32 %v1171, %v1171
  %v1188 = vmul.f32 %v1172, %v1172
  %v1189 = vmul.f32 %v1173, %v1173
  %v1190 = vmul.f32 %v1174, %v1174
  %v1191 = vmul.f32 %v1175, %v1175
  %v1192 = vmul.f32 %v1176, %v1176
  %v1193 = vmul.f32 %v1177, %v1177
  %v1194 = vmul.f32 %v1178, %v1178
  %v1195 = vsel %vm803, %v1179, 0.0
  %v1196 = vsel %vm803, %v1180, 0.0
  %v1197 = vadd.f32 %v1195, %v1196
  %v1198 = vsel %vm803, %v1181, 0.0
  %v1199 = vadd.f32 %v1197, %v1198
  %v1200 = vsel %vm803, %v1182, 0.0
  %v1201 = vadd.f32 %v1199, %v1200
  %v1202 = vsel %vm803, %v1183, 0.0
  %v1203 = vadd.f32 %v1201, %v1202
  %v1204 = vsel %vm803, %v1184, 0.0
  %v1205 = vadd.f32 %v1203, %v1204
  %v1206 = vsel %vm803, %v1185, 0.0
  %v1207 = vadd.f32 %v1205, %v1206
  %v1208 = vsel %vm803, %v1186, 0.0
  %v1209 = vadd.f32 %v1207, %v1208
  %v1210 = vsel %vm803, %v1187, 0.0
  %v1211 = vadd.f32 %v1209, %v1210
  %v1212 = vsel %vm803, %v1188, 0.0
  %v1213 = vadd.f32 %v1211, %v1212
  %v1214 = vsel %vm803, %v1189, 0.0
  %v1215 = vadd.f32 %v1213, %v1214
  %v1216 = vsel %vm803, %v1190, 0.0
  %v1217 = vadd.f32 %v1215, %v1216
  %v1218 = vsel %vm803, %v1191, 0.0
  %v1219 = vadd.f32 %v1217, %v1218
  %v1220 = vsel %vm803, %v1192, 0.0
  %v1221 = vadd.f32 %v1219, %v1220
  %v1222 = vsel %vm803, %v1193, 0.0
  %v1223 = vadd.f32 %v1221, %v1222
  %v1224 = vsel %vm803, %v1194, 0.0
  %v1225 = vadd.f32 %v1223, %v1224
  %v1226 = vrot.slane %v1225, 4
  %v1227 = vadd.f32 %v1225, %v1226
  %v1228 = vrot.slane %v1227, 2
  %v1229 = vadd.f32 %v1227, %v1228
  %v1230 = vrot.slane %v1229, 1
  %v1231 = vadd.f32 %v1229, %v1230
  %v1232 = vmul.f32 %v1231, %v1161
  %v1233 = vld [vmem:[%s2] sm:$0x1]
  %v1234 = vadd.f32 %v1232, 1e-05
  %v1235 = vrsqrt.pop %v1234
  %v1236 = vmul.f32 %v1233, %v1235
  %v1237 = vld [vmem:[%s3] sm:$0x1]
  %v1238 = vmul.f32 %v1162, %v1236
  %v1239 = vsub.f32 %v1237, %v1238
  %v1241 = vlaneseq
  %v1242 = vshrl.u32 %v1241, 7
  %v1243 = vsub.s32 0, %v1242
  %v1244 = vrot.slane %v1236, %v1243
  %v1246 = vmul.f32 %v1046, %v1244
  %v1247 = vmul.f32 %v1051, %v1244
  %v1248 = vmul.f32 %v1056, %v1244
  %v1249 = vmul.f32 %v1061, %v1244
  %v1250 = vmul.f32 %v1066, %v1244
  %v1251 = vmul.f32 %v1071, %v1244
  %v1252 = vmul.f32 %v1076, %v1244
  %v1253 = vmul.f32 %v1081, %v1244
  %v1254 = vmul.f32 %v1086, %v1244
  %v1255 = vmul.f32 %v1091, %v1244
  %v1256 = vmul.f32 %v1096, %v1244
  %v1257 = vmul.f32 %v1101, %v1244
  %v1258 = vmul.f32 %v1106, %v1244
  %v1259 = vmul.f32 %v1111, %v1244
  %v1260 = vmul.f32 %v1116, %v1244
  %v1261 = vmul.f32 %v1121, %v1244
  %v1263 = vlaneseq
  %v1264 = vshrl.u32 %v1263, 7
  %v1265 = vsub.s32 0, %v1264
  %v1266 = vrot.slane %v1239, %v1265
  %v1268 = vadd.f32 %v1246, %v1266
  %v1269 = vadd.f32 %v1247, %v1266
  %v1270 = vadd.f32 %v1248, %v1266
  %v1271 = vadd.f32 %v1249, %v1266
  %v1272 = vadd.f32 %v1250, %v1266
  %v1273 = vadd.f32 %v1251, %v1266
  %v1274 = vadd.f32 %v1252, %v1266
  %v1275 = vadd.f32 %v1253, %v1266
  %v1276 = vadd.f32 %v1254, %v1266
  %v1277 = vadd.f32 %v1255, %v1266
  %v1278 = vadd.f32 %v1256, %v1266
  %v1279 = vadd.f32 %v1257, %v1266
  %v1280 = vadd.f32 %v1258, %v1266
  %v1281 = vadd.f32 %v1259, %v1266
  %v1282 = vadd.f32 %v1260, %v1266
  %v1283 = vadd.f32 %v1261, %v1266
  %v1284 = vmax.f32 %v1268, 0.0
  %v1285 = vmax.f32 %v1269, 0.0
  %v1286 = vmax.f32 %v1270, 0.0
  %v1287 = vmax.f32 %v1271, 0.0
  %v1288 = vmax.f32 %v1272, 0.0
  %v1289 = vmax.f32 %v1273, 0.0
  %v1290 = vmax.f32 %v1274, 0.0
  %v1291 = vmax.f32 %v1275, 0.0
  %v1292 = vmax.f32 %v1276, 0.0
  %v1293 = vmax.f32 %v1277, 0.0
  %v1294 = vmax.f32 %v1278, 0.0
  %v1295 = vmax.f32 %v1279, 0.0
  %v1296 = vmax.f32 %v1280, 0.0
  %v1297 = vmax.f32 %v1281, 0.0
  %v1298 = vmax.f32 %v1282, 0.0
  %v1299 = vmax.f32 %v1283, 0.0
  %v1316 = vrot.slane %v1284, 7
  %v1317 = vrot.slane %v1285, 7
  %v1318 = vrot.slane %v1286, 7
  %v1319 = vrot.slane %v1287, 7
  %v1320 = vrot.slane %v1288, 7
  %v1321 = vrot.slane %v1289, 7
  %v1322 = vrot.slane %v1290, 7
  %v1323 = vrot.slane %v1291, 7
  %v1324 = vrot.slane %v1292, 7
  %v1325 = vrot.slane %v1293, 7
  %v1326 = vrot.slane %v1294, 7
  %v1327 = vrot.slane %v1295, 7
  %v1328 = vrot.slane %v1296, 7
  %v1329 = vrot.slane %v1297, 7
  %v1330 = vrot.slane %v1298, 7
  %v1331 = vrot.slane %v1299, 7
  %v1348 = vsel %vm250, 0.0, %v1316
  %v1349 = vsel %vm250, 0.0, %v1317
  %v1350 = vsel %vm250, 0.0, %v1318
  %v1351 = vsel %vm250, 0.0, %v1319
  %v1352 = vsel %vm250, 0.0, %v1320
  %v1353 = vsel %vm250, 0.0, %v1321
  %v1354 = vsel %vm250, 0.0, %v1322
  %v1355 = vsel %vm250, 0.0, %v1323
  %v1356 = vsel %vm250, 0.0, %v1324
  %v1357 = vsel %vm250, 0.0, %v1325
  %v1358 = vsel %vm250, 0.0, %v1326
  %v1359 = vsel %vm250, 0.0, %v1327
  %v1360 = vsel %vm250, 0.0, %v1328
  %v1361 = vsel %vm250, 0.0, %v1329
  %v1362 = vsel %vm250, 0.0, %v1330
  %v1363 = vsel %vm250, 0.0, %v1331
  %v1364 = vsel %vm250, %v1316, 0.0
  %v1365 = vsel %vm250, %v1317, 0.0
  %v1366 = vsel %vm250, %v1318, 0.0
  %v1367 = vsel %vm250, %v1319, 0.0
  %v1368 = vsel %vm250, %v1320, 0.0
  %v1369 = vsel %vm250, %v1321, 0.0
  %v1370 = vsel %vm250, %v1322, 0.0
  %v1371 = vsel %vm250, %v1323, 0.0
  %v1372 = vsel %vm250, %v1324, 0.0
  %v1373 = vsel %vm250, %v1325, 0.0
  %v1374 = vsel %vm250, %v1326, 0.0
  %v1375 = vsel %vm250, %v1327, 0.0
  %v1376 = vsel %vm250, %v1328, 0.0
  %v1377 = vsel %vm250, %v1329, 0.0
  %v1378 = vsel %vm250, %v1330, 0.0
  %v1379 = vsel %vm250, %v1331, 0.0
  %v1408 = vrot.slane %v1348, 1
  %v1409 = vrot.slane %v1364, 1
  %v1410 = vsel %vm312, %v1408, %v1409
  %v1411 = vrot.slane %v1349, 1
  %v1412 = vrot.slane %v1365, 1
  %v1413 = vsel %vm312, %v1411, %v1412
  %v1414 = vrot.slane %v1350, 1
  %v1415 = vrot.slane %v1366, 1
  %v1416 = vsel %vm312, %v1414, %v1415
  %v1417 = vrot.slane %v1351, 1
  %v1418 = vrot.slane %v1367, 1
  %v1419 = vsel %vm312, %v1417, %v1418
  %v1420 = vrot.slane %v1352, 1
  %v1421 = vrot.slane %v1368, 1
  %v1422 = vsel %vm312, %v1420, %v1421
  %v1423 = vrot.slane %v1353, 1
  %v1424 = vrot.slane %v1369, 1
  %v1425 = vsel %vm312, %v1423, %v1424
  %v1426 = vrot.slane %v1354, 1
  %v1427 = vrot.slane %v1370, 1
  %v1428 = vsel %vm312, %v1426, %v1427
  %v1429 = vrot.slane %v1356, 1
  %v1430 = vrot.slane %v1372, 1
  %v1431 = vsel %vm312, %v1429, %v1430
  %v1432 = vrot.slane %v1357, 1
  %v1433 = vrot.slane %v1373, 1
  %v1434 = vsel %vm312, %v1432, %v1433
  %v1435 = vrot.slane %v1358, 1
  %v1436 = vrot.slane %v1374, 1
  %v1437 = vsel %vm312, %v1435, %v1436
  %v1438 = vrot.slane %v1359, 1
  %v1439 = vrot.slane %v1375, 1
  %v1440 = vsel %vm312, %v1438, %v1439
  %v1441 = vrot.slane %v1360, 1
  %v1442 = vrot.slane %v1376, 1
  %v1443 = vsel %vm312, %v1441, %v1442
  %v1444 = vrot.slane %v1361, 1
  %v1445 = vrot.slane %v1377, 1
  %v1446 = vsel %vm312, %v1444, %v1445
  %v1447 = vrot.slane %v1362, 1
  %v1448 = vrot.slane %v1378, 1
  %v1449 = vsel %vm312, %v1447, %v1448
  %1450 = vrot.lane.b32.xlu0 %v314, 8
  %v1451 = vpop.permute.xlu0 %1450
  %1452 = vrot.lane.b32.xlu0 %v1410, 8
  %v1453 = vpop.permute.xlu0 %1452
  %1454 = vrot.lane.b32.xlu0 %v1413, 8
  %v1455 = vpop.permute.xlu0 %1454
  %1456 = vrot.lane.b32.xlu0 %v1416, 8
  %v1457 = vpop.permute.xlu0 %1456
  %1458 = vrot.lane.b32.xlu0 %v1419, 8
  %v1459 = vpop.permute.xlu0 %1458
  %1460 = vrot.lane.b32.xlu0 %v1422, 8
  %v1461 = vpop.permute.xlu0 %1460
  %1462 = vrot.lane.b32.xlu0 %v1425, 8
  %v1463 = vpop.permute.xlu0 %1462
  %1464 = vrot.lane.b32.xlu0 %v1428, 8
  %v1465 = vpop.permute.xlu0 %1464
  %1466 = vrot.lane.b32.xlu0 %v1431, 8
  %v1467 = vpop.permute.xlu0 %1466
  %1468 = vrot.lane.b32.xlu0 %v1434, 8
  %v1469 = vpop.permute.xlu0 %1468
  %1470 = vrot.lane.b32.xlu0 %v1437, 8
  %v1471 = vpop.permute.xlu0 %1470
  %1472 = vrot.lane.b32.xlu0 %v1440, 8
  %v1473 = vpop.permute.xlu0 %1472
  %1474 = vrot.lane.b32.xlu0 %v1443, 8
  %v1475 = vpop.permute.xlu0 %1474
  %1476 = vrot.lane.b32.xlu0 %v1446, 8
  %v1477 = vpop.permute.xlu0 %1476
  %1478 = vrot.lane.b32.xlu0 %v1449, 8
  %v1479 = vpop.permute.xlu0 %1478
  %v1495 = vrot.slane %v1348, 2
  %v1496 = vrot.slane %v1364, 2
  %v1497 = vsel %vm402, %v1495, %v1496
  %v1498 = vrot.slane %v1349, 2
  %v1499 = vrot.slane %v1365, 2
  %v1500 = vsel %vm402, %v1498, %v1499
  %v1501 = vrot.slane %v1350, 2
  %v1502 = vrot.slane %v1366, 2
  %v1503 = vsel %vm402, %v1501, %v1502
  %v1504 = vrot.slane %v1351, 2
  %v1505 = vrot.slane %v1367, 2
  %v1506 = vsel %vm402, %v1504, %v1505
  %v1507 = vrot.slane %v1352, 2
  %v1508 = vrot.slane %v1368, 2
  %v1509 = vsel %vm402, %v1507, %v1508
  %v1510 = vrot.slane %v1353, 2
  %v1511 = vrot.slane %v1369, 2
  %v1512 = vsel %vm402, %v1510, %v1511
  %v1513 = vrot.slane %v1354, 2
  %v1514 = vrot.slane %v1370, 2
  %v1515 = vsel %vm402, %v1513, %v1514
  %v1516 = vrot.slane %v1356, 2
  %v1517 = vrot.slane %v1372, 2
  %v1518 = vsel %vm402, %v1516, %v1517
  %v1519 = vrot.slane %v1357, 2
  %v1520 = vrot.slane %v1373, 2
  %v1521 = vsel %vm402, %v1519, %v1520
  %v1522 = vrot.slane %v1358, 2
  %v1523 = vrot.slane %v1374, 2
  %v1524 = vsel %vm402, %v1522, %v1523
  %v1525 = vrot.slane %v1359, 2
  %v1526 = vrot.slane %v1375, 2
  %v1527 = vsel %vm402, %v1525, %v1526
  %v1528 = vrot.slane %v1360, 2
  %v1529 = vrot.slane %v1376, 2
  %v1530 = vsel %vm402, %v1528, %v1529
  %v1531 = vrot.slane %v1361, 2
  %v1532 = vrot.slane %v1377, 2
  %v1533 = vsel %vm402, %v1531, %v1532
  %v1534 = vrot.slane %v1362, 2
  %v1535 = vrot.slane %v1378, 2
  %v1536 = vsel %vm402, %v1534, %v1535
  %1537 = vrot.lane.b32.xlu0 %v404, 16
  %v1538 = vpop.permute.xlu0 %1537
  %1539 = vrot.lane.b32.xlu0 %v1497, 16
  %v1540 = vpop.permute.xlu0 %1539
  %1541 = vrot.lane.b32.xlu0 %v1500, 16
  %v1542 = vpop.permute.xlu0 %1541
  %1543 = vrot.lane.b32.xlu0 %v1503, 16
  %v1544 = vpop.permute.xlu0 %1543
  %1545 = vrot.lane.b32.xlu0 %v1506, 16
  %v1546 = vpop.permute.xlu0 %1545
  %1547 = vrot.lane.b32.xlu0 %v1509, 16
  %v1548 = vpop.permute.xlu0 %1547
  %1549 = vrot.lane.b32.xlu0 %v1512, 16
  %v1550 = vpop.permute.xlu0 %1549
  %1551 = vrot.lane.b32.xlu0 %v1515, 16
  %v1552 = vpop.permute.xlu0 %1551
  %1553 = vrot.lane.b32.xlu0 %v1518, 16
  %v1554 = vpop.permute.xlu0 %1553
  %1555 = vrot.lane.b32.xlu0 %v1521, 16
  %v1556 = vpop.permute.xlu0 %1555
  %1557 = vrot.lane.b32.xlu0 %v1524, 16
  %v1558 = vpop.permute.xlu0 %1557
  %1559 = vrot.lane.b32.xlu0 %v1527, 16
  %v1560 = vpop.permute.xlu0 %1559
  %1561 = vrot.lane.b32.xlu0 %v1530, 16
  %v1562 = vpop.permute.xlu0 %1561
  %1563 = vrot.lane.b32.xlu0 %v1533, 16
  %v1564 = vpop.permute.xlu0 %1563
  %1565 = vrot.lane.b32.xlu0 %v1536, 16
  %v1566 = vpop.permute.xlu0 %1565
  %1584 = vrot.lane.b32.xlu0 %v1348, 24
  %v1585 = vpop.permute.xlu0 %1584
  %1586 = vrot.lane.b32.xlu0 %v1349, 24
  %v1587 = vpop.permute.xlu0 %1586
  %1588 = vrot.lane.b32.xlu0 %v1350, 24
  %v1589 = vpop.permute.xlu0 %1588
  %1590 = vrot.lane.b32.xlu0 %v1351, 24
  %v1591 = vpop.permute.xlu0 %1590
  %1592 = vrot.lane.b32.xlu0 %v1352, 24
  %v1593 = vpop.permute.xlu0 %1592
  %1594 = vrot.lane.b32.xlu0 %v1353, 24
  %v1595 = vpop.permute.xlu0 %1594
  %1596 = vrot.lane.b32.xlu0 %v1354, 24
  %v1597 = vpop.permute.xlu0 %1596
  %1598 = vrot.lane.b32.xlu0 %v1355, 24
  %v1599 = vpop.permute.xlu0 %1598
  %1600 = vrot.lane.b32.xlu0 %v1356, 24
  %v1601 = vpop.permute.xlu0 %1600
  %1602 = vrot.lane.b32.xlu0 %v1357, 24
  %v1603 = vpop.permute.xlu0 %1602
  %1604 = vrot.lane.b32.xlu0 %v1358, 24
  %v1605 = vpop.permute.xlu0 %1604
  %1606 = vrot.lane.b32.xlu0 %v1359, 24
  %v1607 = vpop.permute.xlu0 %1606
  %1608 = vrot.lane.b32.xlu0 %v1360, 24
  %v1609 = vpop.permute.xlu0 %1608
  %1610 = vrot.lane.b32.xlu0 %v1361, 24
  %v1611 = vpop.permute.xlu0 %1610
  %1612 = vrot.lane.b32.xlu0 %v1362, 24
  %v1613 = vpop.permute.xlu0 %1612
  %1614 = vrot.lane.b32.xlu0 %v1363, 24
  %v1615 = vpop.permute.xlu0 %1614
  %v1634 = vrot.slane %v1355, 1
  %v1635 = vrot.slane %v1371, 1
  %v1636 = vsel %vm312, %v1634, %v1635
  %v1637 = vrot.slane %v1363, 1
  %v1638 = vrot.slane %v1379, 1
  %v1639 = vsel %vm312, %v1637, %v1638
  %1640 = vrot.lane.b32.xlu0 %v1410, 32
  %v1641 = vpop.permute.xlu0 %1640
  %1642 = vrot.lane.b32.xlu0 %v1413, 32
  %v1643 = vpop.permute.xlu0 %1642
  %1644 = vrot.lane.b32.xlu0 %v1416, 32
  %v1645 = vpop.permute.xlu0 %1644
  %1646 = vrot.lane.b32.xlu0 %v1419, 32
  %v1647 = vpop.permute.xlu0 %1646
  %1648 = vrot.lane.b32.xlu0 %v1422, 32
  %v1649 = vpop.permute.xlu0 %1648
  %1650 = vrot.lane.b32.xlu0 %v1425, 32
  %v1651 = vpop.permute.xlu0 %1650
  %1652 = vrot.lane.b32.xlu0 %v1428, 32
  %v1653 = vpop.permute.xlu0 %1652
  %1654 = vrot.lane.b32.xlu0 %v1636, 32
  %v1655 = vpop.permute.xlu0 %1654
  %1656 = vrot.lane.b32.xlu0 %v1431, 32
  %v1657 = vpop.permute.xlu0 %1656
  %1658 = vrot.lane.b32.xlu0 %v1434, 32
  %v1659 = vpop.permute.xlu0 %1658
  %1660 = vrot.lane.b32.xlu0 %v1437, 32
  %v1661 = vpop.permute.xlu0 %1660
  %1662 = vrot.lane.b32.xlu0 %v1440, 32
  %v1663 = vpop.permute.xlu0 %1662
  %1664 = vrot.lane.b32.xlu0 %v1443, 32
  %v1665 = vpop.permute.xlu0 %1664
  %1666 = vrot.lane.b32.xlu0 %v1446, 32
  %v1667 = vpop.permute.xlu0 %1666
  %1668 = vrot.lane.b32.xlu0 %v1449, 32
  %v1669 = vpop.permute.xlu0 %1668
  %1670 = vrot.lane.b32.xlu0 %v1639, 32
  %v1671 = vpop.permute.xlu0 %1670
  %v1688 = vrot.slane %v1355, 2
  %v1689 = vrot.slane %v1371, 2
  %v1690 = vsel %vm402, %v1688, %v1689
  %v1691 = vrot.slane %v1363, 2
  %v1692 = vrot.slane %v1379, 2
  %v1693 = vsel %vm402, %v1691, %v1692
  %1694 = vrot.lane.b32.xlu0 %v1497, 40
  %v1695 = vpop.permute.xlu0 %1694
  %1696 = vrot.lane.b32.xlu0 %v1500, 40
  %v1697 = vpop.permute.xlu0 %1696
  %1698 = vrot.lane.b32.xlu0 %v1503, 40
  %v1699 = vpop.permute.xlu0 %1698
  %1700 = vrot.lane.b32.xlu0 %v1506, 40
  %v1701 = vpop.permute.xlu0 %1700
  %1702 = vrot.lane.b32.xlu0 %v1509, 40
  %v1703 = vpop.permute.xlu0 %1702
  %1704 = vrot.lane.b32.xlu0 %v1512, 40
  %v1705 = vpop.permute.xlu0 %1704
  %1706 = vrot.lane.b32.xlu0 %v1515, 40
  %v1707 = vpop.permute.xlu0 %1706
  %1708 = vrot.lane.b32.xlu0 %v1690, 40
  %v1709 = vpop.permute.xlu0 %1708
  %1710 = vrot.lane.b32.xlu0 %v1518, 40
  %v1711 = vpop.permute.xlu0 %1710
  %1712 = vrot.lane.b32.xlu0 %v1521, 40
  %v1713 = vpop.permute.xlu0 %1712
  %1714 = vrot.lane.b32.xlu0 %v1524, 40
  %v1715 = vpop.permute.xlu0 %1714
  %1716 = vrot.lane.b32.xlu0 %v1527, 40
  %v1717 = vpop.permute.xlu0 %1716
  %1718 = vrot.lane.b32.xlu0 %v1530, 40
  %v1719 = vpop.permute.xlu0 %1718
  %1720 = vrot.lane.b32.xlu0 %v1533, 40
  %v1721 = vpop.permute.xlu0 %1720
  %1722 = vrot.lane.b32.xlu0 %v1536, 40
  %v1723 = vpop.permute.xlu0 %1722
  %1724 = vrot.lane.b32.xlu0 %v1693, 40
  %v1725 = vpop.permute.xlu0 %1724
  %1742 = vrot.lane.b32.xlu0 %v1349, 48
  %v1743 = vpop.permute.xlu0 %1742
  %1744 = vrot.lane.b32.xlu0 %v1350, 48
  %v1745 = vpop.permute.xlu0 %1744
  %1746 = vrot.lane.b32.xlu0 %v1351, 48
  %v1747 = vpop.permute.xlu0 %1746
  %1748 = vrot.lane.b32.xlu0 %v1352, 48
  %v1749 = vpop.permute.xlu0 %1748
  %1750 = vrot.lane.b32.xlu0 %v1353, 48
  %v1751 = vpop.permute.xlu0 %1750
  %1752 = vrot.lane.b32.xlu0 %v1354, 48
  %v1753 = vpop.permute.xlu0 %1752
  %1754 = vrot.lane.b32.xlu0 %v1355, 48
  %v1755 = vpop.permute.xlu0 %1754
  %1756 = vrot.lane.b32.xlu0 0.0, 48
  %v1757 = vpop.permute.xlu0 %1756
  %1758 = vrot.lane.b32.xlu0 %v1357, 48
  %v1759 = vpop.permute.xlu0 %1758
  %1760 = vrot.lane.b32.xlu0 %v1358, 48
  %v1761 = vpop.permute.xlu0 %1760
  %1762 = vrot.lane.b32.xlu0 %v1359, 48
  %v1763 = vpop.permute.xlu0 %1762
  %1764 = vrot.lane.b32.xlu0 %v1360, 48
  %v1765 = vpop.permute.xlu0 %1764
  %1766 = vrot.lane.b32.xlu0 %v1361, 48
  %v1767 = vpop.permute.xlu0 %1766
  %1768 = vrot.lane.b32.xlu0 %v1362, 48
  %v1769 = vpop.permute.xlu0 %1768
  %1770 = vrot.lane.b32.xlu0 %v1363, 48
  %v1771 = vpop.permute.xlu0 %1770
  %1787 = vrot.lane.b32.xlu0 %v1413, 56
  %v1788 = vpop.permute.xlu0 %1787
  %1789 = vrot.lane.b32.xlu0 %v1416, 56
  %v1790 = vpop.permute.xlu0 %1789
  %1791 = vrot.lane.b32.xlu0 %v1419, 56
  %v1792 = vpop.permute.xlu0 %1791
  %1793 = vrot.lane.b32.xlu0 %v1422, 56
  %v1794 = vpop.permute.xlu0 %1793
  %1795 = vrot.lane.b32.xlu0 %v1425, 56
  %v1796 = vpop.permute.xlu0 %1795
  %1797 = vrot.lane.b32.xlu0 %v1428, 56
  %v1798 = vpop.permute.xlu0 %1797
  %1799 = vrot.lane.b32.xlu0 %v1636, 56
  %v1800 = vpop.permute.xlu0 %1799
  %1801 = vrot.lane.b32.xlu0 %v314, 56
  %v1802 = vpop.permute.xlu0 %1801
  %1803 = vrot.lane.b32.xlu0 %v1434, 56
  %v1804 = vpop.permute.xlu0 %1803
  %1805 = vrot.lane.b32.xlu0 %v1437, 56
  %v1806 = vpop.permute.xlu0 %1805
  %1807 = vrot.lane.b32.xlu0 %v1440, 56
  %v1808 = vpop.permute.xlu0 %1807
  %1809 = vrot.lane.b32.xlu0 %v1443, 56
  %v1810 = vpop.permute.xlu0 %1809
  %1811 = vrot.lane.b32.xlu0 %v1446, 56
  %v1812 = vpop.permute.xlu0 %1811
  %1813 = vrot.lane.b32.xlu0 %v1449, 56
  %v1814 = vpop.permute.xlu0 %1813
  %1815 = vrot.lane.b32.xlu0 %v1639, 56
  %v1816 = vpop.permute.xlu0 %1815
  %1832 = vrot.lane.b32.xlu0 %v1500, 64
  %v1833 = vpop.permute.xlu0 %1832
  %1834 = vrot.lane.b32.xlu0 %v1503, 64
  %v1835 = vpop.permute.xlu0 %1834
  %1836 = vrot.lane.b32.xlu0 %v1506, 64
  %v1837 = vpop.permute.xlu0 %1836
  %1838 = vrot.lane.b32.xlu0 %v1509, 64
  %v1839 = vpop.permute.xlu0 %1838
  %1840 = vrot.lane.b32.xlu0 %v1512, 64
  %v1841 = vpop.permute.xlu0 %1840
  %1842 = vrot.lane.b32.xlu0 %v1515, 64
  %v1843 = vpop.permute.xlu0 %1842
  %1844 = vrot.lane.b32.xlu0 %v1690, 64
  %v1845 = vpop.permute.xlu0 %1844
  %1846 = vrot.lane.b32.xlu0 %v404, 64
  %v1847 = vpop.permute.xlu0 %1846
  %1848 = vrot.lane.b32.xlu0 %v1521, 64
  %v1849 = vpop.permute.xlu0 %1848
  %1850 = vrot.lane.b32.xlu0 %v1524, 64
  %v1851 = vpop.permute.xlu0 %1850
  %1852 = vrot.lane.b32.xlu0 %v1527, 64
  %v1853 = vpop.permute.xlu0 %1852
  %1854 = vrot.lane.b32.xlu0 %v1530, 64
  %v1855 = vpop.permute.xlu0 %1854
  %1856 = vrot.lane.b32.xlu0 %v1533, 64
  %v1857 = vpop.permute.xlu0 %1856
  %1858 = vrot.lane.b32.xlu0 %v1536, 64
  %v1859 = vpop.permute.xlu0 %1858
  %1860 = vrot.lane.b32.xlu0 %v1693, 64
  %v1861 = vpop.permute.xlu0 %1860
  %v1877 = vsel %vm803, 0.0, %v1451
  %v1878 = vsel %vm803, %v1348, %v1453
  %v1879 = vsel %vm803, %v1349, %v1455
  %v1880 = vsel %vm803, %v1350, %v1457
  %v1881 = vsel %vm803, %v1351, %v1459
  %v1882 = vsel %vm803, %v1352, %v1461
  %v1883 = vsel %vm803, %v1353, %v1463
  %v1884 = vsel %vm803, %v1354, %v1465
  %v1885 = vsel %vm803, %v1356, %v1467
  %v1886 = vsel %vm803, %v1357, %v1469
  %v1887 = vsel %vm803, %v1358, %v1471
  %v1888 = vsel %vm803, %v1359, %v1473
  %v1889 = vsel %vm803, %v1360, %v1475
  %v1890 = vsel %vm803, %v1361, %v1477
  %v1891 = vsel %vm803, %v1362, %v1479
  %v1892 = vsel %vm836, %v1877, %v1538
  %v1893 = vsel %vm836, %v1878, %v1540
  %v1894 = vsel %vm836, %v1879, %v1542
  %v1895 = vsel %vm836, %v1880, %v1544
  %v1896 = vsel %vm836, %v1881, %v1546
  %v1897 = vsel %vm836, %v1882, %v1548
  %v1898 = vsel %vm836, %v1883, %v1550
  %v1899 = vsel %vm836, %v1884, %v1552
  %v1900 = vsel %vm836, %v1885, %v1554
  %v1901 = vsel %vm836, %v1886, %v1556
  %v1902 = vsel %vm836, %v1887, %v1558
  %v1903 = vsel %vm836, %v1888, %v1560
  %v1904 = vsel %vm836, %v1889, %v1562
  %v1905 = vsel %vm836, %v1890, %v1564
  %v1906 = vsel %vm836, %v1891, %v1566
  %v1907 = vsel %vm870, %v1892, %v1585
  %v1908 = vsel %vm870, %v1893, %v1587
  %v1909 = vsel %vm870, %v1894, %v1589
  %v1910 = vsel %vm870, %v1895, %v1591
  %v1911 = vsel %vm870, %v1896, %v1593
  %v1912 = vsel %vm870, %v1897, %v1595
  %v1913 = vsel %vm870, %v1898, %v1597
  %v1914 = vsel %vm870, %v1899, %v1599
  %v1915 = vsel %vm870, %v1892, %v1601
  %v1916 = vsel %vm870, %v1900, %v1603
  %v1917 = vsel %vm870, %v1901, %v1605
  %v1918 = vsel %vm870, %v1902, %v1607
  %v1919 = vsel %vm870, %v1903, %v1609
  %v1920 = vsel %vm870, %v1904, %v1611
  %v1921 = vsel %vm870, %v1905, %v1613
  %v1922 = vsel %vm870, %v1906, %v1615
  %v1923 = vsel %vm904, %v1907, %v1641
  %v1924 = vsel %vm904, %v1908, %v1643
  %v1925 = vsel %vm904, %v1909, %v1645
  %v1926 = vsel %vm904, %v1910, %v1647
  %v1927 = vsel %vm904, %v1911, %v1649
  %v1928 = vsel %vm904, %v1912, %v1651
  %v1929 = vsel %vm904, %v1913, %v1653
  %v1930 = vsel %vm904, %v1914, %v1655
  %v1931 = vsel %vm904, %v1915, %v1657
  %v1932 = vsel %vm904, %v1916, %v1659
  %v1933 = vsel %vm904, %v1917, %v1661
  %v1934 = vsel %vm904, %v1918, %v1663
  %v1935 = vsel %vm904, %v1919, %v1665
  %v1936 = vsel %vm904, %v1920, %v1667
  %v1937 = vsel %vm904, %v1921, %v1669
  %v1938 = vsel %vm904, %v1922, %v1671
  %vm1939 = vcmask 326656
  %v1940 = vsel %vm1939, %v1923, %v1695
  %v1941 = vsel %vm1939, %v1924, %v1697
  %v1942 = vsel %vm1939, %v1925, %v1699
  %v1943 = vsel %vm1939, %v1926, %v1701
  %v1944 = vsel %vm1939, %v1927, %v1703
  %v1945 = vsel %vm1939, %v1928, %v1705
  %v1946 = vsel %vm1939, %v1929, %v1707
  %v1947 = vsel %vm1939, %v1930, %v1709
  %v1948 = vsel %vm1939, %v1931, %v1711
  %v1949 = vsel %vm1939, %v1932, %v1713
  %v1950 = vsel %vm1939, %v1933, %v1715
  %v1951 = vsel %vm1939, %v1934, %v1717
  %v1952 = vsel %vm1939, %v1935, %v1719
  %v1953 = vsel %vm1939, %v1936, %v1721
  %v1954 = vsel %vm1939, %v1937, %v1723
  %v1955 = vsel %vm1939, %v1938, %v1725
  %vm1956 = vcmask 392192
  %v1957 = vsel %vm1956, %v1940, %v1743
  %v1958 = vsel %vm1956, %v1941, %v1745
  %v1959 = vsel %vm1956, %v1942, %v1747
  %v1960 = vsel %vm1956, %v1943, %v1749
  %v1961 = vsel %vm1956, %v1944, %v1751
  %v1962 = vsel %vm1956, %v1945, %v1753
  %v1963 = vsel %vm1956, %v1946, %v1755
  %v1964 = vsel %vm1956, %v1947, %v1757
  %v1965 = vsel %vm1956, %v1948, %v1759
  %v1966 = vsel %vm1956, %v1949, %v1761
  %v1967 = vsel %vm1956, %v1950, %v1763
  %v1968 = vsel %vm1956, %v1951, %v1765
  %v1969 = vsel %vm1956, %v1952, %v1767
  %v1970 = vsel %vm1956, %v1953, %v1769
  %v1971 = vsel %vm1956, %v1954, %v1771
  %v1972 = vsel %vm1956, %v1955, %v1757
  %vm1973 = vcmask 457728
  %v1974 = vsel %vm1973, %v1957, %v1788
  %v1975 = vsel %vm1973, %v1958, %v1790
  %v1976 = vsel %vm1973, %v1959, %v1792
  %v1977 = vsel %vm1973, %v1960, %v1794
  %v1978 = vsel %vm1973, %v1961, %v1796
  %v1979 = vsel %vm1973, %v1962, %v1798
  %v1980 = vsel %vm1973, %v1963, %v1800
  %v1981 = vsel %vm1973, %v1964, %v1802
  %v1982 = vsel %vm1973, %v1965, %v1804
  %v1983 = vsel %vm1973, %v1966, %v1806
  %v1984 = vsel %vm1973, %v1967, %v1808
  %v1985 = vsel %vm1973, %v1968, %v1810
  %v1986 = vsel %vm1973, %v1969, %v1812
  %v1987 = vsel %vm1973, %v1970, %v1814
  %v1988 = vsel %vm1973, %v1971, %v1816
  %v1989 = vsel %vm1973, %v1972, %v1802
  %vm1990 = vcmask 523264
  %v1991 = vsel %vm1990, %v1974, %v1833
  %v1992 = vsel %vm1990, %v1975, %v1835
  %v1993 = vsel %vm1990, %v1976, %v1837
  %v1994 = vsel %vm1990, %v1977, %v1839
  %v1995 = vsel %vm1990, %v1978, %v1841
  %v1996 = vsel %vm1990, %v1979, %v1843
  %v1997 = vsel %vm1990, %v1980, %v1845
  %v1998 = vsel %vm1990, %v1981, %v1847
  %v1999 = vsel %vm1990, %v1982, %v1849
  %v2000 = vsel %vm1990, %v1983, %v1851
  %v2001 = vsel %vm1990, %v1984, %v1853
  %v2002 = vsel %vm1990, %v1985, %v1855
  %v2003 = vsel %vm1990, %v1986, %v1857
  %v2004 = vsel %vm1990, %v1987, %v1859
  %v2005 = vsel %vm1990, %v1988, %v1861
  %v2006 = vsel %vm1990, %v1989, %v1847
  %v2007 = vld [vmem:[%s4] sm:$0xff]
  %v2008 = vld [vmem:[%s4 + $0x8] sm:$0xff]
  %v2009 = vld [vmem:[%s4 + $0x10] sm:$0xff]
  %v2010 = vld [vmem:[%s4 + $0x18] sm:$0xff]
  %v2011 = vld [vmem:[%s4 + $0x20] sm:$0xff]
  %v2012 = vld [vmem:[%s4 + $0x28] sm:$0xff]
  %v2013 = vld [vmem:[%s4 + $0x30] sm:$0xff]
  %v2014 = vld [vmem:[%s4 + $0x38] sm:$0xff]
  %v2015 = vld [vmem:[%s4 + $0x40] sm:$0xff]
  %vm2016 = vcmask 588800
  %v2018 = vsel %vm2016, %v1991, 0
  %v2021 = vsel %vm2016, %v1992, 0
  %v2024 = vsel %vm2016, %v1993, 0
  %v2027 = vsel %vm2016, %v1994, 0
  %v2030 = vsel %vm2016, %v1995, 0
  %v2033 = vsel %vm2016, %v1996, 0
  %v2036 = vsel %vm2016, %v1997, 0
  %v2039 = vsel %vm2016, %v1998, 0
  %v2042 = vsel %vm2016, %v1999, 0
  %v2045 = vsel %vm2016, %v2000, 0
  %v2048 = vsel %vm2016, %v2001, 0
  %v2051 = vsel %vm2016, %v2002, 0
  %v2054 = vsel %vm2016, %v2003, 0
  %v2057 = vsel %vm2016, %v2004, 0
  %v2060 = vsel %vm2016, %v2005, 0
  %v2063 = vsel %vm2016, %v2006, 0
  %2065 = vmatprep.subr.mxu0 0.0
  %2066 = vmatpush1.msra.mxu0 0.0
  %2067 = vmatprep.subr.mxu0 0.0
  %2068 = vmatpush1.msra.mxu0 0.0
  %2069 = vmatprep.subr.mxu0 0.0
  %2070 = vmatpush1.msra.mxu0 0.0
  %2071 = vmatprep.subr.mxu0 0.0
  %2072 = vmatpush1.msra.mxu0 0.0
  %2073 = vmatprep.subr.mxu0 0.0
  %2074 = vmatpush1.msra.mxu0 0.0
  %2075 = vmatprep.subr.mxu0 0.0
  %2076 = vmatpush1.msra.mxu0 0.0
  %2077 = vmatprep.subr.mxu0 0.0
  %2078 = vmatpush1.msra.mxu0 0.0
  %2079 = vmatprep.subr.mxu0 0.0
  %2080 = vmatpush1.msra.mxu0 %v2015
  %2081 = vmatprep.subr.mxu0 0.0
  %2082 = vmatpush1.msra.mxu0 %v2014
  %2083 = vmatprep.subr.mxu0 0.0
  %2084 = vmatpush1.msra.mxu0 %v2013
  %2085 = vmatprep.subr.mxu0 0.0
  %2086 = vmatpush1.msra.mxu0 %v2012
  %2087 = vmatprep.subr.mxu0 0.0
  %2088 = vmatpush1.msra.mxu0 %v2011
  %2089 = vmatprep.subr.mxu0 0.0
  %2090 = vmatpush1.msra.mxu0 %v2010
  %2091 = vmatprep.subr.mxu0 0.0
  %2092 = vmatpush1.msra.mxu0 %v2009
  %2093 = vmatprep.subr.mxu0 0.0
  %2094 = vmatpush1.msra.mxu0 %v2008
  %2095 = vmatprep.subr.mxu0 0.0
  %2096 = vmatpush1.msra.mxu0 %v2007
  %2097 = vmatprep.subr.mxu0 0.0
  %2098 = vmatpush2.msra.mxu0 0.0
  %2099 = vmatprep.subr.mxu0 0.0
  %2100 = vmatpush2.msra.mxu0 0.0
  %2101 = vmatprep.subr.mxu0 0.0
  %2102 = vmatpush2.msra.mxu0 0.0
  %2103 = vmatprep.subr.mxu0 0.0
  %2104 = vmatpush2.msra.mxu0 0.0
  %2105 = vmatprep.subr.mxu0 0.0
  %2106 = vmatpush2.msra.mxu0 0.0
  %2107 = vmatprep.subr.mxu0 0.0
  %2108 = vmatpush2.msra.mxu0 0.0
  %2109 = vmatprep.subr.mxu0 0.0
  %2110 = vmatpush2.msra.mxu0 0.0
  %2111 = vmatprep.subr.mxu0 0.0
  %2112 = vmatpush2.msra.mxu0 0.0
  %2113 = vmatprep.subr.mxu0 0.0
  %2114 = vmatpush2.msra.mxu0 0.0
  %2115 = vmatprep.subr.mxu0 0.0
  %2116 = vmatpush2.msra.mxu0 0.0
  %2117 = vmatprep.subr.mxu0 0.0
  %2118 = vmatpush2.msra.mxu0 0.0
  %2119 = vmatprep.subr.mxu0 0.0
  %2120 = vmatpush2.msra.mxu0 0.0
  %2121 = vmatprep.subr.mxu0 0.0
  %2122 = vmatpush2.msra.mxu0 0.0
  %2123 = vmatprep.subr.mxu0 0.0
  %2124 = vmatpush2.msra.mxu0 0.0
  %2125 = vmatprep.subr.mxu0 0.0
  %2126 = vmatpush2.msra.mxu0 0.0
  %2127 = vmatprep.subr.mxu0 0.0
  %2128 = vmatpush2.msra.mxu0 0.0
  %2129 = vmatprep.mubr.f32.mxu0 0.0
  %2130 = vmatmul.mubr.f32.gmra.mxu0 %v2018
  %v2131 = vpop.f32.mrf.mxu0
  %v2132 = vadd.f32 0.0, %v2131
  %v2133 = vpop.f32.mrf.mxu0
  %2134 = vmatprep.mubr.f32.mxu0 0.0
  %2135 = vmatmul.mubr.f32.gmra.mxu0 %v2021
  %v2136 = vpop.f32.mrf.mxu0
  %v2137 = vadd.f32 0.0, %v2136
  %v2138 = vpop.f32.mrf.mxu0
  %2139 = vmatprep.mubr.f32.mxu0 0.0
  %2140 = vmatmul.mubr.f32.gmra.mxu0 %v2024
  %v2141 = vpop.f32.mrf.mxu0
  %v2142 = vadd.f32 0.0, %v2141
  %v2143 = vpop.f32.mrf.mxu0
  %2144 = vmatprep.mubr.f32.mxu0 0.0
  %2145 = vmatmul.mubr.f32.gmra.mxu0 %v2027
  %v2146 = vpop.f32.mrf.mxu0
  %v2147 = vadd.f32 0.0, %v2146
  %v2148 = vpop.f32.mrf.mxu0
  %2149 = vmatprep.mubr.f32.mxu0 0.0
  %2150 = vmatmul.mubr.f32.gmra.mxu0 %v2030
  %v2151 = vpop.f32.mrf.mxu0
  %v2152 = vadd.f32 0.0, %v2151
  %v2153 = vpop.f32.mrf.mxu0
  %2154 = vmatprep.mubr.f32.mxu0 0.0
  %2155 = vmatmul.mubr.f32.gmra.mxu0 %v2033
  %v2156 = vpop.f32.mrf.mxu0
  %v2157 = vadd.f32 0.0, %v2156
  %v2158 = vpop.f32.mrf.mxu0
  %2159 = vmatprep.mubr.f32.mxu0 0.0
  %2160 = vmatmul.mubr.f32.gmra.mxu0 %v2036
  %v2161 = vpop.f32.mrf.mxu0
  %v2162 = vadd.f32 0.0, %v2161
  %v2163 = vpop.f32.mrf.mxu0
  %2164 = vmatprep.mubr.f32.mxu0 0.0
  %2165 = vmatmul.mubr.f32.gmra.mxu0 %v2039
  %v2166 = vpop.f32.mrf.mxu0
  %v2167 = vadd.f32 0.0, %v2166
  %v2168 = vpop.f32.mrf.mxu0
  %2169 = vmatprep.mubr.f32.mxu0 0.0
  %2170 = vmatmul.mubr.f32.gmra.mxu0 %v2042
  %v2171 = vpop.f32.mrf.mxu0
  %v2172 = vadd.f32 0.0, %v2171
  %v2173 = vpop.f32.mrf.mxu0
  %2174 = vmatprep.mubr.f32.mxu0 0.0
  %2175 = vmatmul.mubr.f32.gmra.mxu0 %v2045
  %v2176 = vpop.f32.mrf.mxu0
  %v2177 = vadd.f32 0.0, %v2176
  %v2178 = vpop.f32.mrf.mxu0
  %2179 = vmatprep.mubr.f32.mxu0 0.0
  %2180 = vmatmul.mubr.f32.gmra.mxu0 %v2048
  %v2181 = vpop.f32.mrf.mxu0
  %v2182 = vadd.f32 0.0, %v2181
  %v2183 = vpop.f32.mrf.mxu0
  %2184 = vmatprep.mubr.f32.mxu0 0.0
  %2185 = vmatmul.mubr.f32.gmra.mxu0 %v2051
  %v2186 = vpop.f32.mrf.mxu0
  %v2187 = vadd.f32 0.0, %v2186
  %v2188 = vpop.f32.mrf.mxu0
  %2189 = vmatprep.mubr.f32.mxu0 0.0
  %2190 = vmatmul.mubr.f32.gmra.mxu0 %v2054
  %v2191 = vpop.f32.mrf.mxu0
  %v2192 = vadd.f32 0.0, %v2191
  %v2193 = vpop.f32.mrf.mxu0
  %2194 = vmatprep.mubr.f32.mxu0 0.0
  %2195 = vmatmul.mubr.f32.gmra.mxu0 %v2057
  %v2196 = vpop.f32.mrf.mxu0
  %v2197 = vadd.f32 0.0, %v2196
  %v2198 = vpop.f32.mrf.mxu0
  %2199 = vmatprep.mubr.f32.mxu0 0.0
  %2200 = vmatmul.mubr.f32.gmra.mxu0 %v2060
  %v2201 = vpop.f32.mrf.mxu0
  %v2202 = vadd.f32 0.0, %v2201
  %v2203 = vpop.f32.mrf.mxu0
  %2204 = vmatprep.mubr.f32.mxu0 0.0
  %2205 = vmatmul.mubr.f32.gmra.mxu0 %v2063
  %v2206 = vpop.f32.mrf.mxu0
  %v2207 = vadd.f32 0.0, %v2206
  %v2208 = vpop.f32.mrf.mxu0
  %2209 = vdwg.mxu0
  %v2210 = vsel %vm803, %v2132, 0.0
  %v2211 = vsel %vm803, %v2137, 0.0
  %v2212 = vadd.f32 %v2210, %v2211
  %v2213 = vsel %vm803, %v2142, 0.0
  %v2214 = vadd.f32 %v2212, %v2213
  %v2215 = vsel %vm803, %v2147, 0.0
  %v2216 = vadd.f32 %v2214, %v2215
  %v2217 = vsel %vm803, %v2152, 0.0
  %v2218 = vadd.f32 %v2216, %v2217
  %v2219 = vsel %vm803, %v2157, 0.0
  %v2220 = vadd.f32 %v2218, %v2219
  %v2221 = vsel %vm803, %v2162, 0.0
  %v2222 = vadd.f32 %v2220, %v2221
  %v2223 = vsel %vm803, %v2167, 0.0
  %v2224 = vadd.f32 %v2222, %v2223
  %v2225 = vsel %vm803, %v2172, 0.0
  %v2226 = vadd.f32 %v2224, %v2225
  %v2227 = vsel %vm803, %v2177, 0.0
  %v2228 = vadd.f32 %v2226, %v2227
  %v2229 = vsel %vm803, %v2182, 0.0
  %v2230 = vadd.f32 %v2228, %v2229
  %v2231 = vsel %vm803, %v2187, 0.0
  %v2232 = vadd.f32 %v2230, %v2231
  %v2233 = vsel %vm803, %v2192, 0.0
  %v2234 = vadd.f32 %v2232, %v2233
  %v2235 = vsel %vm803, %v2197, 0.0
  %v2236 = vadd.f32 %v2234, %v2235
  %v2237 = vsel %vm803, %v2202, 0.0
  %v2238 = vadd.f32 %v2236, %v2237
  %v2239 = vsel %vm803, %v2207, 0.0
  %v2240 = vadd.f32 %v2238, %v2239
  %v2241 = vrot.slane %v2240, 4
  %v2242 = vadd.f32 %v2240, %v2241
  %v2243 = vrot.slane %v2242, 2
  %v2244 = vadd.f32 %v2242, %v2243
  %v2245 = vrot.slane %v2244, 1
  %v2246 = vadd.f32 %v2244, %v2245
  %v2247 = vmul.f32 %v2246, %v1161
  %v2248 = vsub.f32 %v2132, %v2247
  %v2249 = vsub.f32 %v2137, %v2247
  %v2250 = vsub.f32 %v2142, %v2247
  %v2251 = vsub.f32 %v2147, %v2247
  %v2252 = vsub.f32 %v2152, %v2247
  %v2253 = vsub.f32 %v2157, %v2247
  %v2254 = vsub.f32 %v2162, %v2247
  %v2255 = vsub.f32 %v2167, %v2247
  %v2256 = vsub.f32 %v2172, %v2247
  %v2257 = vsub.f32 %v2177, %v2247
  %v2258 = vsub.f32 %v2182, %v2247
  %v2259 = vsub.f32 %v2187, %v2247
  %v2260 = vsub.f32 %v2192, %v2247
  %v2261 = vsub.f32 %v2197, %v2247
  %v2262 = vsub.f32 %v2202, %v2247
  %v2263 = vsub.f32 %v2207, %v2247
  %v2264 = vmul.f32 %v2248, %v2248
  %v2265 = vmul.f32 %v2249, %v2249
  %v2266 = vmul.f32 %v2250, %v2250
  %v2267 = vmul.f32 %v2251, %v2251
  %v2268 = vmul.f32 %v2252, %v2252
  %v2269 = vmul.f32 %v2253, %v2253
  %v2270 = vmul.f32 %v2254, %v2254
  %v2271 = vmul.f32 %v2255, %v2255
  %v2272 = vmul.f32 %v2256, %v2256
  %v2273 = vmul.f32 %v2257, %v2257
  %v2274 = vmul.f32 %v2258, %v2258
  %v2275 = vmul.f32 %v2259, %v2259
  %v2276 = vmul.f32 %v2260, %v2260
  %v2277 = vmul.f32 %v2261, %v2261
  %v2278 = vmul.f32 %v2262, %v2262
  %v2279 = vmul.f32 %v2263, %v2263
  %v2280 = vsel %vm803, %v2264, 0.0
  %v2281 = vsel %vm803, %v2265, 0.0
  %v2282 = vadd.f32 %v2280, %v2281
  %v2283 = vsel %vm803, %v2266, 0.0
  %v2284 = vadd.f32 %v2282, %v2283
  %v2285 = vsel %vm803, %v2267, 0.0
  %v2286 = vadd.f32 %v2284, %v2285
  %v2287 = vsel %vm803, %v2268, 0.0
  %v2288 = vadd.f32 %v2286, %v2287
  %v2289 = vsel %vm803, %v2269, 0.0
  %v2290 = vadd.f32 %v2288, %v2289
  %v2291 = vsel %vm803, %v2270, 0.0
  %v2292 = vadd.f32 %v2290, %v2291
  %v2293 = vsel %vm803, %v2271, 0.0
  %v2294 = vadd.f32 %v2292, %v2293
  %v2295 = vsel %vm803, %v2272, 0.0
  %v2296 = vadd.f32 %v2294, %v2295
  %v2297 = vsel %vm803, %v2273, 0.0
  %v2298 = vadd.f32 %v2296, %v2297
  %v2299 = vsel %vm803, %v2274, 0.0
  %v2300 = vadd.f32 %v2298, %v2299
  %v2301 = vsel %vm803, %v2275, 0.0
  %v2302 = vadd.f32 %v2300, %v2301
  %v2303 = vsel %vm803, %v2276, 0.0
  %v2304 = vadd.f32 %v2302, %v2303
  %v2305 = vsel %vm803, %v2277, 0.0
  %v2306 = vadd.f32 %v2304, %v2305
  %v2307 = vsel %vm803, %v2278, 0.0
  %v2308 = vadd.f32 %v2306, %v2307
  %v2309 = vsel %vm803, %v2279, 0.0
  %v2310 = vadd.f32 %v2308, %v2309
  %v2311 = vrot.slane %v2310, 4
  %v2312 = vadd.f32 %v2310, %v2311
  %v2313 = vrot.slane %v2312, 2
  %v2314 = vadd.f32 %v2312, %v2313
  %v2315 = vrot.slane %v2314, 1
  %v2316 = vadd.f32 %v2314, %v2315
  %v2317 = vmul.f32 %v2316, %v1161
  %v2318 = vld [vmem:[%s5] sm:$0x1]
  %v2319 = vadd.f32 %v2317, 1e-05
  %v2320 = vrsqrt.pop %v2319
  %v2321 = vmul.f32 %v2318, %v2320
  %v2322 = vld [vmem:[%s6] sm:$0x1]
  %v2323 = vmul.f32 %v2247, %v2321
  %v2324 = vsub.f32 %v2322, %v2323
  %v2326 = vlaneseq
  %v2327 = vshrl.u32 %v2326, 7
  %v2328 = vsub.s32 0, %v2327
  %v2329 = vrot.slane %v2321, %v2328
  %v2331 = vmul.f32 %v2132, %v2329
  %v2332 = vmul.f32 %v2137, %v2329
  %v2333 = vmul.f32 %v2142, %v2329
  %v2334 = vmul.f32 %v2147, %v2329
  %v2335 = vmul.f32 %v2152, %v2329
  %v2336 = vmul.f32 %v2157, %v2329
  %v2337 = vmul.f32 %v2162, %v2329
  %v2338 = vmul.f32 %v2167, %v2329
  %v2339 = vmul.f32 %v2172, %v2329
  %v2340 = vmul.f32 %v2177, %v2329
  %v2341 = vmul.f32 %v2182, %v2329
  %v2342 = vmul.f32 %v2187, %v2329
  %v2343 = vmul.f32 %v2192, %v2329
  %v2344 = vmul.f32 %v2197, %v2329
  %v2345 = vmul.f32 %v2202, %v2329
  %v2346 = vmul.f32 %v2207, %v2329
  %v2348 = vlaneseq
  %v2349 = vshrl.u32 %v2348, 7
  %v2350 = vsub.s32 0, %v2349
  %v2351 = vrot.slane %v2324, %v2350
  %v2353 = vadd.f32 %v2331, %v2351
  %v2354 = vadd.f32 %v2332, %v2351
  %v2355 = vadd.f32 %v2333, %v2351
  %v2356 = vadd.f32 %v2334, %v2351
  %v2357 = vadd.f32 %v2335, %v2351
  %v2358 = vadd.f32 %v2336, %v2351
  %v2359 = vadd.f32 %v2337, %v2351
  %v2360 = vadd.f32 %v2338, %v2351
  %v2361 = vadd.f32 %v2339, %v2351
  %v2362 = vadd.f32 %v2340, %v2351
  %v2363 = vadd.f32 %v2341, %v2351
  %v2364 = vadd.f32 %v2342, %v2351
  %v2365 = vadd.f32 %v2343, %v2351
  %v2366 = vadd.f32 %v2344, %v2351
  %v2367 = vadd.f32 %v2345, %v2351
  %v2368 = vadd.f32 %v2346, %v2351
  %v2369 = vmax.f32 %v2353, 0.0
  %v2370 = vmax.f32 %v2354, 0.0
  %v2371 = vmax.f32 %v2355, 0.0
  %v2372 = vmax.f32 %v2356, 0.0
  %v2373 = vmax.f32 %v2357, 0.0
  %v2374 = vmax.f32 %v2358, 0.0
  %v2375 = vmax.f32 %v2359, 0.0
  %v2376 = vmax.f32 %v2360, 0.0
  %v2377 = vmax.f32 %v2361, 0.0
  %v2378 = vmax.f32 %v2362, 0.0
  %v2379 = vmax.f32 %v2363, 0.0
  %v2380 = vmax.f32 %v2364, 0.0
  %v2381 = vmax.f32 %v2365, 0.0
  %v2382 = vmax.f32 %v2366, 0.0
  %v2383 = vmax.f32 %v2367, 0.0
  %v2384 = vmax.f32 %v2368, 0.0
  %2385 = vxpose.xlu0.b32.start [1/16] %v2369, 128
  %2386 = vxpose.xlu0.b32.cont [2/16] %v2370, 128
  %2387 = vxpose.xlu0.b32.cont [3/16] %v2371, 128
  %2388 = vxpose.xlu0.b32.cont [4/16] %v2372, 128
  %2389 = vxpose.xlu0.b32.cont [5/16] %v2373, 128
  %2390 = vxpose.xlu0.b32.cont [6/16] %v2374, 128
  %2391 = vxpose.xlu0.b32.cont [7/16] %v2375, 128
  %2392 = vxpose.xlu0.b32.cont [8/16] %v2376, 128
  %2393 = vxpose.xlu0.b32.cont [9/16] %v2377, 128
  %2394 = vxpose.xlu0.b32.cont [10/16] %v2378, 128
  %2395 = vxpose.xlu0.b32.cont [11/16] %v2379, 128
  %2396 = vxpose.xlu0.b32.cont [12/16] %v2380, 128
  %2397 = vxpose.xlu0.b32.cont [13/16] %v2381, 128
  %2398 = vxpose.xlu0.b32.cont [14/16] %v2382, 128
  %2399 = vxpose.xlu0.b32.cont [15/16] %v2383, 128
  %2400 = vxpose.xlu0.b32.end [16/16] %v2384, 128
  %v2401 = vpop.trf.xlu0
  %v2402 = vpop.trf.xlu0
  %v2403 = vpop.trf.xlu0
  %v2404 = vpop.trf.xlu0
  %v2405 = vpop.trf.xlu0
  %v2406 = vpop.trf.xlu0
  %v2407 = vpop.trf.xlu0
  %v2408 = vpop.trf.xlu0
  %v2409 = vpop.trf.xlu0
  %v2410 = vpop.trf.xlu0
  %v2411 = vpop.trf.xlu0
  %v2412 = vpop.trf.xlu0
  %v2413 = vpop.trf.xlu0
  %v2414 = vpop.trf.xlu0
  %v2415 = vpop.trf.xlu0
  %v2416 = vpop.trf.xlu0
  %2417 = vst [vmem:[%s7] sm:$0xff] %v2401
  // Predicated region
  $region30: #{down_forward.1} parent=0 // pred_check
    _
  $region31: #{down_forward.1} parent=0 // pred_check_branch
    %2419 = sbr.rel (0) target = $region33
  $region32: #{down_forward.1} parent=0 // pred_region
    _
  $region33: #{down_forward.1} parent=0 // pred_fallthru
    _
  // Predicated region
  $region34: #{down_forward.1} parent=0 // pred_check
    _
  $region35: #{down_forward.1} parent=0 // pred_check_branch
    %2421 = sbr.rel (0) target = $region37
  $region36: #{down_forward.1} parent=0 // pred_region
    _
  $region37: #{down_forward.1} parent=0 // pred_fallthru
    _

</llo_original>
